<compile_context>
chip_gen: v5e
topology: v5e:2x2
jax: 0.10.0
libtpu: 0.0.40
codegen_flags: <defaults>
</compile_context>

<pallas_src>
import functools

import jax
import jax.numpy as jnp
import numpy as np
from jax.experimental import pallas as pl
from jax.experimental.pallas import tpu as pltpu


# --------------------------------------------------------------------------
# Kernel
# --------------------------------------------------------------------------
def _dbb_fused_kernel(K, TH, W, CIN, COUT, xp_ref, w_ref, b_ref, o_ref):
    # xp_ref : (1, H+2P, W+2P, CIN) bf16  padded image, resident per batch
    # w_ref  : (K*K*CIN, COUT)     bf16  fused (BN+1x1+identity folded) weight
    # b_ref  : (1, COUT)           f32   fused bias (shift_k + shift_1)
    # o_ref  : (1, TH, W, COUT)    f32   one output row band
    t = pl.program_id(1)
    row0 = pl.multiple_of(t * TH, TH)

    # im2col: gather the K*K taps of the row band and stack them on the
    # channel (lane) axis -> one (TH*W, K*K*CIN) LHS for a single MXU matmul.
    taps = []
    for di in range(K):
        for dj in range(K):
            taps.append(xp_ref[0, pl.ds(row0 + di, TH), dj:dj + W, :])  # (TH, W, CIN)
    patch = jnp.concatenate(taps, axis=-1).reshape(TH * W, K * K * CIN)

    acc = jnp.dot(patch, w_ref[...], preferred_element_type=jnp.float32)  # (TH*W, COUT)
    res = jnp.maximum(acc + b_ref[...], 0.0)
    o_ref[0] = res.reshape(TH, W, COUT).astype(o_ref.dtype)


# --------------------------------------------------------------------------
# Host-side reparameterization (exact, no approximation)
# --------------------------------------------------------------------------
def _fold_dbb_params(w_kxk_oihw, w_1x1_oihw, bn_k, bn_1, K, eps=1e-5):
    """Fold BN + 1x1 branch + identity into a single KxK weight and bias.

    Returns:
      w_mat: (K*K*CIN, COUT) f32, tap-major / CIN-inner (matches im2col columns)
      bias : (COUT,) f32
    """
    COUT, CIN = w_kxk_oihw.shape[:2]
    P = K // 2
    gk, bk, mk, vk = bn_k
    g1, b1, m1, v1 = bn_1
    scale_k = gk / jnp.sqrt(vk + eps)
    shift_k = bk - mk * scale_k
    scale_1 = g1 / jnp.sqrt(v1 + eps)
    shift_1 = b1 - m1 * scale_1

    w_fused = w_kxk_oihw * scale_k[:, None, None, None]            # BN(conv_kxk)
    center = w_1x1_oihw[:, :, 0, 0] * scale_1[:, None]             # BN(conv_1x1)
    center = center + jnp.eye(COUT, CIN, dtype=w_fused.dtype)      # identity shortcut
    w_fused = w_fused.at[:, :, P, P].add(center)

    bias = shift_k + shift_1
    # OIHW -> (K, K, CIN, COUT) -> (K*K*CIN, COUT)
    w_mat = jnp.transpose(w_fused, (2, 3, 1, 0)).reshape(K * K * CIN, COUT)
    return w_mat, bias


def _pick_row_block(H, W, target_m=256):
    """Largest divisor TH of H with TH*W <= target_m (>=1)."""
    best = 1
    cap = max(target_m, W)
    for th in range(1, H + 1):
        if H % th == 0 and th * W <= cap:
            best = th
    return best


# --------------------------------------------------------------------------
# Wrapper (PyTorch-style NCHW / OIHW interface)
# --------------------------------------------------------------------------
def dbb_block_forward(x_nchw, w_kxk_oihw, w_1x1_oihw, bn_k, bn_1, kernel_size=3):
    N, CIN, H, W = x_nchw.shape
    COUT = w_kxk_oihw.shape[0]
    K = kernel_size
    P = K // 2
    assert CIN == COUT, "identity shortcut (stride=1) requires in_ch == out_ch"

    w_mat_f32, bias_f32 = _fold_dbb_params(w_kxk_oihw, w_1x1_oihw, bn_k, bn_1, K)
    w_mat = w_mat_f32.astype(jnp.bfloat16)
    bias = bias_f32.astype(jnp.float32).reshape(1, COUT)

    # NCHW -> NHWC, cast to bf16 *before* padding (half-size HBM copy), pad spatially.
    x_nhwc = jnp.transpose(x_nchw, (0, 2, 3, 1)).astype(jnp.bfloat16)
    x_pad = jnp.pad(x_nhwc, ((0, 0), (P, P), (P, P), (0, 0)))

    TH = _pick_row_block(H, W)
    Hp, Wp = H + 2 * P, W + 2 * P
    kern = functools.partial(_dbb_fused_kernel, K, TH, W, CIN, COUT)

    # TODO(synk): for large H*W*CIN (v7x 64 MiB VMEM) tile the W axis with a halo
    # via manual DMA instead of keeping the whole padded image resident per batch.
    out_nhwc = pl.pallas_call(
        kern,
        out_shape=jax.ShapeDtypeStruct((N, H, W, COUT), jnp.float32),
        grid=(N, H // TH),
        in_specs=[
            # padded image: block index depends only on n -> resident across the
            # row-band axis (one DMA per batch element).
            pl.BlockSpec((1, Hp, Wp, CIN), lambda n, t: (n, 0, 0, 0)),
            pl.BlockSpec((K * K * CIN, COUT), lambda n, t: (0, 0)),
            pl.BlockSpec((1, COUT), lambda n, t: (0, 0)),
        ],
        out_specs=pl.BlockSpec((1, TH, W, COUT), lambda n, t: (n, t, 0, 0)),
        compiler_params=pltpu.CompilerParams(
            dimension_semantics=("parallel", "parallel")),
    )(x_pad, w_mat, bias)

    return jnp.transpose(out_nhwc, (0, 3, 1, 2))


# --------------------------------------------------------------------------
# References
# --------------------------------------------------------------------------
def _reference_f32(x, wk, w1, bn_k, bn_1, K=3):
    """Pure-JAX f32 reference of DBBBlock.forward (stride=1)."""
    eps = 1e-5
    P = K // 2

    def bn(y, p):
        g, b, m, v = p
        s = g / jnp.sqrt(v + eps)
        return (y - m[None, :, None, None]) * s[None, :, None, None] + b[None, :, None, None]

    dn = ('NCHW', 'OIHW', 'NCHW')
    hi = jax.lax.Precision.HIGHEST
    yk = jax.lax.conv_general_dilated(x, wk, (1, 1), [(P, P), (P, P)],
                                      dimension_numbers=dn, precision=hi)
    y1 = jax.lax.conv_general_dilated(x, w1, (1, 1), [(0, 0), (0, 0)],
                                      dimension_numbers=dn, precision=hi)
    return jnp.maximum(bn(yk, bn_k) + bn(y1, bn_1) + x, 0.0)


def _reference_bf16_fused(x, wk, w1, bn_k, bn_1, K=3):
    """Same reparameterization + bf16 quantization as the kernel, f32 accumulation."""
    N, CIN, H, W = x.shape
    COUT = wk.shape[0]
    P = K // 2
    w_mat, bias = _fold_dbb_params(wk, w1, bn_k, bn_1, K)
    w_oihw = jnp.transpose(w_mat.reshape(K, K, CIN, COUT), (3, 2, 0, 1))
    xq = x.astype(jnp.bfloat16).astype(jnp.float32)
    wq = w_oihw.astype(jnp.bfloat16).astype(jnp.float32)
    y = jax.lax.conv_general_dilated(xq, wq, (1, 1), [(P, P), (P, P)],
                                     dimension_numbers=('NCHW', 'OIHW', 'NCHW'),
                                     precision=jax.lax.Precision.HIGHEST)
    return jnp.maximum(y + bias[None, :, None, None], 0.0)


# --------------------------------------------------------------------------
# Test
# --------------------------------------------------------------------------
if __name__ == "__main__":
    key = jax.random.PRNGKey(0)
    N, C, H, W = 2, 4, 16, 16          # in_ch == out_ch == 4
    K = 3

    ks = jax.random.split(key, 9)
    x = jax.random.normal(ks[0], (N, C, H, W), jnp.float32)
    # ConvModule(norm_cfg=BN) -> conv has no bias; only conv weight + BN params.
    w_kxk = jax.random.normal(ks[1], (C, C, K, K), jnp.float32) * 0.1
    w_1x1 = jax.random.normal(ks[2], (C, C, 1, 1), jnp.float32) * 0.1
    # BN (eval mode): gamma, beta, running_mean, running_var (=0.3 per init_weight)
    bn_k = (jax.random.normal(ks[3], (C,), jnp.float32) * 0.1 + 1.0,
            jax.random.normal(ks[4], (C,), jnp.float32) * 0.1,
            jax.random.normal(ks[5], (C,), jnp.float32) * 0.1,
            jnp.full((C,), 0.3, jnp.float32))
    bn_1 = (jax.random.normal(ks[6], (C,), jnp.float32) * 0.1 + 1.0,
            jax.random.normal(ks[7], (C,), jnp.float32) * 0.1,
            jax.random.normal(ks[8], (C,), jnp.float32) * 0.1,
            jnp.full((C,), 0.3, jnp.float32))

    out = dbb_block_forward(x, w_kxk, w_1x1, bn_k, bn_1, kernel_size=K)
    out = jax.block_until_ready(out)

    # Tight check: same bf16 quantization / reparameterization, f32 accumulation.
    ref_q = _reference_bf16_fused(x, w_kxk, w_1x1, bn_k, bn_1, K)
    np.testing.assert_allclose(np.asarray(out), np.asarray(ref_q),
                               rtol=1e-3, atol=1e-3)

    # Semantic check against the original (f32) DBBBlock.forward form.
    ref = _reference_f32(x, w_kxk, w_1x1, bn_k, bn_1, K)
    np.testing.assert_allclose(np.asarray(out), np.asarray(ref),
                               rtol=5e-2, atol=5e-2)

    print("KERNEL_OK")
</pallas_src>

<mosaic_0001>
module attributes {stable_mosaic.version = 11 : i64} {
  func.func @_dbb_fused_kernel(%arg0: i32, %arg1: i32, %arg2: memref<1x18x18x4xbf16, #tpu.memory_space<vmem>>, %arg3: memref<36x4xbf16, #tpu.memory_space<vmem>>, %arg4: memref<1x4xf32, #tpu.memory_space<vmem>>, %arg5: memref<1x16x16x4xf32, #tpu.memory_space<vmem>>) attributes {dimension_semantics = [#tpu.dimension_semantics<parallel>, #tpu.dimension_semantics<parallel>], iteration_bounds = array<i64: 2, 1>, scalar_prefetch = 0 : i64, scratch_operands = 0 : i64, tpu.core_type = #tpu.core_type<tc>, window_params = [{transform_indices = @transform_0, window_bounds = array<i64: 1, 18, 18, 4>}, {pipeline_mode = #tpu.pipeline_mode<synchronous>, transform_indices = @transform_1, window_bounds = array<i64: 36, 4>}, {pipeline_mode = #tpu.pipeline_mode<synchronous>, transform_indices = @transform_2, window_bounds = array<i64: 1, 4>}, {transform_indices = @transform_3, window_bounds = array<i64: 1, 16, 16, 4>}]} {
    %c16_i32 = arith.constant 16 : i32
    %0 = arith.muli %arg1, %c16_i32 : i32
    %1 = tpu.assume_multiple %0, 16 : i32
    %c0_i32 = arith.constant 0 : i32
    %2 = arith.addi %1, %c0_i32 : i32
    %c0 = arith.constant 0 : index
    %3 = arith.index_cast %2 : i32 to index
    %c0_0 = arith.constant 0 : index
    %c0_1 = arith.constant 0 : index
    %4 = vector.load %arg2[%c0, %3, %c0_0, %c0_1] : memref<1x18x18x4xbf16, #tpu.memory_space<vmem>>, vector<1x16x16x4xbf16>
    %5 = vector.shape_cast %4 : vector<1x16x16x4xbf16> to vector<16x16x4xbf16>
    %c0_i32_2 = arith.constant 0 : i32
    %6 = arith.addi %1, %c0_i32_2 : i32
    %c0_3 = arith.constant 0 : index
    %7 = arith.index_cast %6 : i32 to index
    %c1 = arith.constant 1 : index
    %c0_4 = arith.constant 0 : index
    %8 = vector.load %arg2[%c0_3, %7, %c1, %c0_4] : memref<1x18x18x4xbf16, #tpu.memory_space<vmem>>, vector<1x16x16x4xbf16>
    %9 = vector.shape_cast %8 : vector<1x16x16x4xbf16> to vector<16x16x4xbf16>
    %c0_i32_5 = arith.constant 0 : i32
    %10 = arith.addi %1, %c0_i32_5 : i32
    %c0_6 = arith.constant 0 : index
    %11 = arith.index_cast %10 : i32 to index
    %c2 = arith.constant 2 : index
    %c0_7 = arith.constant 0 : index
    %12 = vector.load %arg2[%c0_6, %11, %c2, %c0_7] : memref<1x18x18x4xbf16, #tpu.memory_space<vmem>>, vector<1x16x16x4xbf16>
    %13 = vector.shape_cast %12 : vector<1x16x16x4xbf16> to vector<16x16x4xbf16>
    %c1_i32 = arith.constant 1 : i32
    %14 = arith.addi %1, %c1_i32 : i32
    %c0_8 = arith.constant 0 : index
    %15 = arith.index_cast %14 : i32 to index
    %c0_9 = arith.constant 0 : index
    %c0_10 = arith.constant 0 : index
    %16 = vector.load %arg2[%c0_8, %15, %c0_9, %c0_10] : memref<1x18x18x4xbf16, #tpu.memory_space<vmem>>, vector<1x16x16x4xbf16>
    %17 = vector.shape_cast %16 : vector<1x16x16x4xbf16> to vector<16x16x4xbf16>
    %c1_i32_11 = arith.constant 1 : i32
    %18 = arith.addi %1, %c1_i32_11 : i32
    %c0_12 = arith.constant 0 : index
    %19 = arith.index_cast %18 : i32 to index
    %c1_13 = arith.constant 1 : index
    %c0_14 = arith.constant 0 : index
    %20 = vector.load %arg2[%c0_12, %19, %c1_13, %c0_14] : memref<1x18x18x4xbf16, #tpu.memory_space<vmem>>, vector<1x16x16x4xbf16>
    %21 = vector.shape_cast %20 : vector<1x16x16x4xbf16> to vector<16x16x4xbf16>
    %c1_i32_15 = arith.constant 1 : i32
    %22 = arith.addi %1, %c1_i32_15 : i32
    %c0_16 = arith.constant 0 : index
    %23 = arith.index_cast %22 : i32 to index
    %c2_17 = arith.constant 2 : index
    %c0_18 = arith.constant 0 : index
    %24 = vector.load %arg2[%c0_16, %23, %c2_17, %c0_18] : memref<1x18x18x4xbf16, #tpu.memory_space<vmem>>, vector<1x16x16x4xbf16>
    %25 = vector.shape_cast %24 : vector<1x16x16x4xbf16> to vector<16x16x4xbf16>
    %c2_i32 = arith.constant 2 : i32
    %26 = arith.addi %1, %c2_i32 : i32
    %c0_19 = arith.constant 0 : index
    %27 = arith.index_cast %26 : i32 to index
    %c0_20 = arith.constant 0 : index
    %c0_21 = arith.constant 0 : index
    %28 = vector.load %arg2[%c0_19, %27, %c0_20, %c0_21] : memref<1x18x18x4xbf16, #tpu.memory_space<vmem>>, vector<1x16x16x4xbf16>
    %29 = vector.shape_cast %28 : vector<1x16x16x4xbf16> to vector<16x16x4xbf16>
    %c2_i32_22 = arith.constant 2 : i32
    %30 = arith.addi %1, %c2_i32_22 : i32
    %c0_23 = arith.constant 0 : index
    %31 = arith.index_cast %30 : i32 to index
    %c1_24 = arith.constant 1 : index
    %c0_25 = arith.constant 0 : index
    %32 = vector.load %arg2[%c0_23, %31, %c1_24, %c0_25] : memref<1x18x18x4xbf16, #tpu.memory_space<vmem>>, vector<1x16x16x4xbf16>
    %33 = vector.shape_cast %32 : vector<1x16x16x4xbf16> to vector<16x16x4xbf16>
    %c2_i32_26 = arith.constant 2 : i32
    %34 = arith.addi %1, %c2_i32_26 : i32
    %c0_27 = arith.constant 0 : index
    %35 = arith.index_cast %34 : i32 to index
    %c2_28 = arith.constant 2 : index
    %c0_29 = arith.constant 0 : index
    %36 = vector.load %arg2[%c0_27, %35, %c2_28, %c0_29] : memref<1x18x18x4xbf16, #tpu.memory_space<vmem>>, vector<1x16x16x4xbf16>
    %37 = vector.shape_cast %36 : vector<1x16x16x4xbf16> to vector<16x16x4xbf16>
    %38 = tpu.concatenate %5, %9, %13, %17, %21, %25, %29, %33, %37 in 2 : vector<16x16x4xbf16>, vector<16x16x4xbf16>, vector<16x16x4xbf16>, vector<16x16x4xbf16>, vector<16x16x4xbf16>, vector<16x16x4xbf16>, vector<16x16x4xbf16>, vector<16x16x4xbf16>, vector<16x16x4xbf16> -> vector<16x16x36xbf16>
    %39 = vector.shape_cast %38 : vector<16x16x36xbf16> to vector<256x36xbf16>
    %c0_30 = arith.constant 0 : index
    %c0_31 = arith.constant 0 : index
    %40 = vector.load %arg3[%c0_30, %c0_31] : memref<36x4xbf16, #tpu.memory_space<vmem>>, vector<36x4xbf16>
    %cst = arith.constant dense<0.000000e+00> : vector<256x4xf32>
    %41 = tpu.matmul %39, %40, %cst {dimension_numbers = #tpu.dot_dimension_numbers<[1], [0], [0], [1], [0, 0, 1, 1], [], []>} : vector<256x36xbf16>, vector<36x4xbf16>, vector<256x4xf32> -> vector<256x4xf32>
    %c0_32 = arith.constant 0 : index
    %c0_33 = arith.constant 0 : index
    %42 = vector.load %arg4[%c0_32, %c0_33] : memref<1x4xf32, #tpu.memory_space<vmem>>, vector<1x4xf32>
    %43 = vector.broadcast %42 : vector<1x4xf32> to vector<256x4xf32>
    %44 = arith.addf %41, %43 : vector<256x4xf32>
    %cst_34 = arith.constant 0.000000e+00 : f32
    %45 = vector.broadcast %cst_34 : f32 to vector<256x4xf32>
    %46 = arith.maximumf %44, %45 : vector<256x4xf32>
    %47 = vector.shape_cast %46 : vector<256x4xf32> to vector<16x16x4xf32>
    %c0_35 = arith.constant 0 : index
    %c0_36 = arith.constant 0 : index
    %c0_37 = arith.constant 0 : index
    %c0_38 = arith.constant 0 : index
    %48 = vector.load %arg5[%c0_35, %c0_36, %c0_37, %c0_38] : memref<1x16x16x4xf32, #tpu.memory_space<vmem>>, vector<1x16x16x4xf32>
    %49 = vector.shape_cast %48 : vector<1x16x16x4xf32> to vector<16x16x4xf32>
    %50 = vector.shape_cast %47 : vector<16x16x4xf32> to vector<1x16x16x4xf32>
    tpu.vector_store %arg5[%c0_35, %c0_36, %c0_37, %c0_38], %50 {strides = array<i32>} : memref<1x16x16x4xf32, #tpu.memory_space<vmem>>, vector<1x16x16x4xf32>,
    return
  }
  func.func @transform_0(%arg0: i32, %arg1: i32) -> (i32, i32, i32, i32) {
    %c0_i32 = arith.constant 0 : i32
    %c0_i32_0 = arith.constant 0 : i32
    %c0_i32_1 = arith.constant 0 : i32
    %c0_i32_2 = arith.constant 0 : i32
    return %arg0, %c0_i32, %c0_i32_0, %c0_i32_1 : i32, i32, i32, i32
  }
  func.func @transform_1(%arg0: i32, %arg1: i32) -> (i32, i32) {
    %c0_i32 = arith.constant 0 : i32
    %c0_i32_0 = arith.constant 0 : i32
    %c0_i32_1 = arith.constant 0 : i32
    return %c0_i32, %c0_i32_0 : i32, i32
  }
  func.func @transform_2(%arg0: i32, %arg1: i32) -> (i32, i32) {
    %c0_i32 = arith.constant 0 : i32
    %c0_i32_0 = arith.constant 0 : i32
    %c0_i32_1 = arith.constant 0 : i32
    return %c0_i32, %c0_i32_0 : i32, i32
  }
  func.func @transform_3(%arg0: i32, %arg1: i32) -> (i32, i32, i32, i32) {
    %c0_i32 = arith.constant 0 : i32
    %c0_i32_0 = arith.constant 0 : i32
    %c0_i32_1 = arith.constant 0 : i32
    return %arg0, %arg1, %c0_i32, %c0_i32_0 : i32, i32, i32, i32
  }
}

</mosaic_0001>

<llo_original>
// kernel: tpu_custom_call.1
$region0: #{tpu_custom_call.1}
  #allocation0 [shape = 'u32[]', space=smem, size = 0x4, offset = 0x4, fixed_abs, tag = 'smem constant byte address 0x4 - core index']
  #allocation1 [shape = 'u32[72,128]{1,0:T(1,128)}', space=vmem, size = 0x9000, scoped, tag = 'internal scratch']
  %s0 = inlined_call_operand.vmem [shape: bf16[2,18,18,4], index: 0, kind: input, shape index: {}]
  %s1 = inlined_call_operand.vmem [shape: bf16[36,4], index: 1, kind: input, shape index: {}]
  %s2 = inlined_call_operand.vmem [shape: f32[1,4], index: 2, kind: input, shape index: {}]
  %s3 = inlined_call_operand.vmem [shape: f32[2,16,16,4], index: 3, kind: output, shape index: {}]
  %s4 = sld [smem:[#allocation0]]
  $region45: #{tpu_custom_call.1} parent=0
    _
  %s6 = ssub.s32 1, %s4
  %s7 = scalar_select 0, %s6, %s4
  loop: start=0, step=1, limit=4
  $region2: #{tpu_custom_call.1} parent=0 // loop_pre_header
    _
  $region3: #{tpu_custom_call.1} parent=0 // loop_header
    %s9 = sphi 0, %s13
    %p10 = scmp.ge.s32.totalorder %s9, 4
    %s16 = sphi 0, %s28
    %s17 = sphi 0, %s24
    %s18 = sphi 0, %s16
    %s19 = sphi 0, %s17
    %s20 = sphi 0, %s18
    %s21 = sphi 0, %s19
    %s31 = sphi 0, %s33
    %s34 = sphi 0, %s31
    %s35 = sphi 0, %s34
    %s51 = sphi 0, %s35
    %s55 = sphi 0, %s55
    %s57 = sphi 0, %s55
    %s58 = sphi 0, %s57
    %s72 = sphi 0, %s58
    %s76 = sphi 0, %s76
    %s78 = sphi 0, %s76
    %s79 = sphi 0, %s78
    %s93 = sphi 0, %s79
    %s101 = sphi 0, %s103
    %s104 = sphi 0, %s101
    %s105 = sphi 0, %s104
    %s121 = sphi 0, %s105
  $region4: #{tpu_custom_call.1} parent=0 // loop_header_branch
    %12 = sbr.rel (%p10) target = $region8
  $region5: #{tpu_custom_call.1} parent=0 // loop_body
    %s14 = ssub.s32 %s9, 1
    %s15 = ssub.s32 %s9, 2
    %s22 = sadd.s32 1, %s17
    %p23 = scmp.ge.s32.totalorder %s22, 1
    %s24 = scalar_select %p23, 0, %s22
    %s25 = sadd.s32 1, %s16
    %s26 = scalar_select %p23, %s25, %s16
    %p27 = scmp.ge.s32.totalorder %s26, 2
    %s28 = scalar_select %p27, 0, %s26
    %s29 = ssub.s32 %s16, %s28
    %p30 = scmp.eq.s32.totalorder %s29, 0
    %s32 = sadd.s32 %s31, 1
    %s33 = scalar_select %p30, %s31, %s32
    %p36 = pneg %p30
    %p37 = scmp.eq.s32.totalorder %s9, 1
    %p38 = por %p36, %p37
    %p39 = scmp.ne.s32.totalorder %s31, %s34
    %p40 = scmp.eq.s32.totalorder %s9, 0
    %p41 = por %p39, %p40
    %p42 = scmp.ne.s32.totalorder %s31, %s34
    %p43 = scmp.eq.s32.totalorder %s14, 1
    %p44 = por %p42, %p43
    %p45 = scmp.ne.s32.totalorder %s34, %s35
    %p46 = scmp.eq.s32.totalorder %s14, 0
    %p47 = por %p45, %p46
    %p48 = scmp.ne.s32.totalorder %s34, %s35
    %p49 = scmp.eq.s32.totalorder %s15, 1
    %p50 = por %p48, %p49
    %p52 = scmp.ne.s32.totalorder %s35, %s51
    %p53 = scmp.eq.s32.totalorder %s15, 0
    %p54 = por %p52, %p53
    %s56 = sadd.s32 %s55, 1
    %p59 = scmp.eq.s32.totalorder %s9, 1
    %p60 = scmp.ne.s32.totalorder %s55, %s57
    %p61 = scmp.eq.s32.totalorder %s9, 0
    %p62 = por %p60, %p61
    %p63 = scmp.ne.s32.totalorder %s55, %s57
    %p64 = scmp.eq.s32.totalorder %s14, 1
    %p65 = por %p63, %p64
    %p66 = scmp.ne.s32.totalorder %s57, %s58
    %p67 = scmp.eq.s32.totalorder %s14, 0
    %p68 = por %p66, %p67
    %p69 = scmp.ne.s32.totalorder %s57, %s58
    %p70 = scmp.eq.s32.totalorder %s15, 1
    %p71 = por %p69, %p70
    %p73 = scmp.ne.s32.totalorder %s58, %s72
    %p74 = scmp.eq.s32.totalorder %s15, 0
    %p75 = por %p73, %p74
    %s77 = sadd.s32 %s76, 1
    %p80 = scmp.eq.s32.totalorder %s9, 1
    %p81 = scmp.ne.s32.totalorder %s76, %s78
    %p82 = scmp.eq.s32.totalorder %s9, 0
    %p83 = por %p81, %p82
    %p84 = scmp.ne.s32.totalorder %s76, %s78
    %p85 = scmp.eq.s32.totalorder %s14, 1
    %p86 = por %p84, %p85
    %p87 = scmp.ne.s32.totalorder %s78, %s79
    %p88 = scmp.eq.s32.totalorder %s14, 0
    %p89 = por %p87, %p88
    %p90 = scmp.ne.s32.totalorder %s78, %s79
    %p91 = scmp.eq.s32.totalorder %s15, 1
    %p92 = por %p90, %p91
    %p94 = scmp.ne.s32.totalorder %s79, %s93
    %p95 = scmp.eq.s32.totalorder %s15, 0
    %p96 = por %p94, %p95
    %s97 = ssub.s32 %s16, %s28
    %s98 = ssub.s32 %s17, %s24
    %s99 = sor.u32 %s97, %s98
    %p100 = scmp.eq.s32.totalorder %s99, 0
    %s102 = sadd.s32 %s101, 1
    %s103 = scalar_select %p100, %s101, %s102
    %p106 = pneg %p100
    %p107 = scmp.eq.s32.totalorder %s9, 1
    %p108 = por %p106, %p107
    %p109 = scmp.ne.s32.totalorder %s101, %s104
    %p110 = scmp.eq.s32.totalorder %s9, 0
    %p111 = por %p109, %p110
    %p112 = scmp.ne.s32.totalorder %s101, %s104
    %p113 = scmp.eq.s32.totalorder %s14, 1
    %p114 = por %p112, %p113
    %p115 = scmp.ne.s32.totalorder %s104, %s105
    %p116 = scmp.eq.s32.totalorder %s14, 0
    %p117 = por %p115, %p116
    %p118 = scmp.ne.s32.totalorder %s104, %s105
    %p119 = scmp.eq.s32.totalorder %s15, 1
    %p120 = por %p118, %p119
    %p122 = scmp.ne.s32.totalorder %s105, %s121
    %p123 = scmp.eq.s32.totalorder %s15, 0
    %p124 = por %p122, %p123
    %p125 = scmp.le.s32.totalorder 1, %s9
    %p126 = scmp.lt.s32.totalorder %s9, 3
    %p127 = pnand %p125, %p126
    %p128 = pneg %p127
    // Predicated region
    $region9: #{tpu_custom_call.1} parent=5 // pred_check
      _
    $region10: #{tpu_custom_call.1} parent=5 // pred_check_branch
      %130 = sbr.rel (%p127) target = $region12
    $region11: #{tpu_custom_call.1} parent=5 // pred_region
      %s131 = ssub.s32 %s9, 1
      // Predicated region
      $region13: #{tpu_custom_call.1} parent=11 // pred_check
        %p132 = pneg %p68
      $region14: #{tpu_custom_call.1} parent=11 // pred_check_branch
        %134 = sbr.rel (%p132) target = $region16
      $region15: #{tpu_custom_call.1} parent=11 // pred_region
        _
      $region16: #{tpu_custom_call.1} parent=11 // pred_fallthru
        _
      // Predicated region
      $region17: #{tpu_custom_call.1} parent=11 // pred_check
        %p135 = pneg %p89
      $region18: #{tpu_custom_call.1} parent=11 // pred_check_branch
        %137 = sbr.rel (%p135) target = $region20
      $region19: #{tpu_custom_call.1} parent=11 // pred_region
        _
      $region20: #{tpu_custom_call.1} parent=11 // pred_fallthru
        _
    $region12: #{tpu_custom_call.1} parent=5 // pred_fallthru
      _
    %p138 = scmp.lt.s32.totalorder %s9, 2
    // Predicated region
    $region21: #{tpu_custom_call.1} parent=5 // pred_check
      %p139 = pneg %p138
    $region22: #{tpu_custom_call.1} parent=5 // pred_check_branch
      %141 = sbr.rel (%p139) target = $region24
    $region23: #{tpu_custom_call.1} parent=5 // pred_region
      // Predicated region
      $region25: #{tpu_custom_call.1} parent=23 // pred_check
        %p142 = pneg %p41
      $region26: #{tpu_custom_call.1} parent=23 // pred_check_branch
        %144 = sbr.rel (%p142) target = $region28
      $region27: #{tpu_custom_call.1} parent=23 // pred_region
        %p145 = scmp.lt.s32.totalorder %s16, 1
        %s146 = scalar_select %p145, %s16, 1
        %s147 = smul.addr %s146, 54
        %s148 = smul.addr %s147, 4
        %s149 = scalar_lea.vmem %s0, %s148
      $region28: #{tpu_custom_call.1} parent=23 // pred_fallthru
        _
    $region24: #{tpu_custom_call.1} parent=5 // pred_fallthru
      _
    %p150 = scmp.le.s32.totalorder 1, %s9
    %p151 = scmp.lt.s32.totalorder %s9, 3
    %p152 = pnand %p150, %p151
    %p153 = pneg %p152
    // Predicated region
    $region29: #{tpu_custom_call.1} parent=5 // pred_check
      _
    $region30: #{tpu_custom_call.1} parent=5 // pred_check_branch
      %155 = sbr.rel (%p152) target = $region32
    $region31: #{tpu_custom_call.1} parent=5 // pred_region
      %s156 = ssub.s32 %s9, 1
      %p157 = scmp.lt.s32.totalorder %s18, 1
      %s158 = scalar_select %p157, %s18, 1
      %s159 = smul.addr %s158, 54
      %s160 = smul.addr %s159, 4
      %s161 = scalar_lea.vmem %s0, %s160
      %p162 = pneg %p47
      %p163 = pneg %p44
      %p164 = pneg %p68
      %p165 = pneg %p65
      %p166 = pneg %p89
      %p167 = pneg %p86
      %p168 = pneg %p117
      %p169 = pneg %p114
      %s170 = smul.u32 16, %s19
      %p171 = scmp.lt.s32.totalorder %s18, 1
      %s172 = scalar_select %p171, %s18, 1
      %p173 = scmp.lt.s32.totalorder %s170, 15
      %s174 = scalar_select %p173, %s170, 15
      %s175 = smul.addr %s174, 2
      %s176 = smul.addr %s172, 32
      %s177 = sadd.s32 %s175, %s176
      %s178 = smul.addr %s177, 8
      %s179 = scalar_lea.vmem %s3, %s178
      %p180 = scmp.lt.s32.totalorder %s18, 1
      %s181 = scalar_select %p180, %s18, 1
      %s182 = smul.addr %s181, 54
      %s183 = smul.addr %s182, 4
      %s184 = scalar_lea.vmem %s0, %s183
      %s185 = smul.u32 16, %s19
      %p186 = scmp.lt.s32.totalorder %s18, 1
      %s187 = scalar_select %p186, %s18, 1
      %p188 = scmp.lt.s32.totalorder %s185, 15
      %s189 = scalar_select %p188, %s185, 15
      %s190 = smul.addr %s189, 2
      %s191 = smul.addr %s187, 32
      %s192 = sadd.s32 %s190, %s191
      %s193 = smul.addr %s192, 8
      %s194 = scalar_lea.vmem %s3, %s193
      %s195 = smul.u32 16, %s19
      %s197 = smul.u32 %s19, 16
      %s198 = smul.u32 %s197, 3
      %s199 = smul.addr %s198, 4
      %s200 = scalar_lea.vmem %s184, %s199
      %v201 = vld [vmem:[%s200] sm:$0xf]
      %v202 = vld [vmem:[%s200 + $0x4] sm:$0xf]
      %v203 = vld [vmem:[%s200 + $0xc] sm:$0xf]
      %v204 = vld [vmem:[%s200 + $0x10] sm:$0xf]
      %v205 = vld [vmem:[%s200 + $0x18] sm:$0xf]
      %v206 = vld [vmem:[%s200 + $0x1c] sm:$0xf]
      %v207 = vld [vmem:[%s200 + $0x24] sm:$0xf]
      %v208 = vld [vmem:[%s200 + $0x28] sm:$0xf]
      %v209 = vld [vmem:[%s200 + $0x30] sm:$0xf]
      %v210 = vld [vmem:[%s200 + $0x34] sm:$0xf]
      %v211 = vld [vmem:[%s200 + $0x3c] sm:$0xf]
      %v212 = vld [vmem:[%s200 + $0x40] sm:$0xf]
      %v213 = vld [vmem:[%s200 + $0x48] sm:$0xf]
      %v214 = vld [vmem:[%s200 + $0x4c] sm:$0xf]
      %v215 = vld [vmem:[%s200 + $0x54] sm:$0xf]
      %v216 = vld [vmem:[%s200 + $0x58] sm:$0xf]
      %v217 = vld [vmem:[%s200 + $0x60] sm:$0xf]
      %v218 = vld [vmem:[%s200 + $0x64] sm:$0xf]
      %v219 = vld [vmem:[%s200 + $0x6c] sm:$0xf]
      %v220 = vld [vmem:[%s200 + $0x70] sm:$0xf]
      %v221 = vld [vmem:[%s200 + $0x78] sm:$0xf]
      %v222 = vld [vmem:[%s200 + $0x7c] sm:$0xf]
      %v223 = vld [vmem:[%s200 + $0x84] sm:$0xf]
      %v224 = vld [vmem:[%s200 + $0x88] sm:$0xf]
      %v225 = vld [vmem:[%s200 + $0x90] sm:$0xf]
      %v226 = vld [vmem:[%s200 + $0x94] sm:$0xf]
      %v227 = vld [vmem:[%s200 + $0x9c] sm:$0xf]
      %v228 = vld [vmem:[%s200 + $0xa0] sm:$0xf]
      %v229 = vld [vmem:[%s200 + $0xa8] sm:$0xf]
      %v230 = vld [vmem:[%s200 + $0xac] sm:$0xf]
      %v231 = vld [vmem:[%s200 + $0xb4] sm:$0xf]
      %v232 = vld [vmem:[%s200 + $0xb8] sm:$0xf]
      %v233 = vld [vmem:[%s200 + $0x8] sm:$0x1]
      %v234 = vld [vmem:[%s200 + $0x14] sm:$0x1]
      %v235 = vld [vmem:[%s200 + $0x20] sm:$0x1]
      %v236 = vld [vmem:[%s200 + $0x2c] sm:$0x1]
      %v237 = vld [vmem:[%s200 + $0x38] sm:$0x1]
      %v238 = vld [vmem:[%s200 + $0x44] sm:$0x1]
      %v239 = vld [vmem:[%s200 + $0x50] sm:$0x1]
      %v240 = vld [vmem:[%s200 + $0x5c] sm:$0x1]
      %v241 = vld [vmem:[%s200 + $0x68] sm:$0x1]
      %v242 = vld [vmem:[%s200 + $0x74] sm:$0x1]
      %v243 = vld [vmem:[%s200 + $0x80] sm:$0x1]
      %v244 = vld [vmem:[%s200 + $0x8c] sm:$0x1]
      %v245 = vld [vmem:[%s200 + $0x98] sm:$0x1]
      %v246 = vld [vmem:[%s200 + $0xa4] sm:$0x1]
      %v247 = vld [vmem:[%s200 + $0xb0] sm:$0x1]
      %v248 = vld [vmem:[%s200 + $0xbc] sm:$0x1]
      %v249 = vld [vmem:[%s200] sm:$0xe]
      %v250 = vld [vmem:[%s200 + $0xc] sm:$0xe]
      %v251 = vld [vmem:[%s200 + $0x18] sm:$0xe]
      %v252 = vld [vmem:[%s200 + $0x24] sm:$0xe]
      %v253 = vld [vmem:[%s200 + $0x30] sm:$0xe]
      %v254 = vld [vmem:[%s200 + $0x3c] sm:$0xe]
      %v255 = vld [vmem:[%s200 + $0x48] sm:$0xe]
      %v256 = vld [vmem:[%s200 + $0x54] sm:$0xe]
      %v257 = vld [vmem:[%s200 + $0x60] sm:$0xe]
      %v258 = vld [vmem:[%s200 + $0x6c] sm:$0xe]
      %v259 = vld [vmem:[%s200 + $0x78] sm:$0xe]
      %v260 = vld [vmem:[%s200 + $0x84] sm:$0xe]
      %v261 = vld [vmem:[%s200 + $0x90] sm:$0xe]
      %v262 = vld [vmem:[%s200 + $0x9c] sm:$0xe]
      %v263 = vld [vmem:[%s200 + $0xa8] sm:$0xe]
      %v264 = vld [vmem:[%s200 + $0xb4] sm:$0xe]
      %s265 = sadd.s32 %s197, 1
      %s266 = smul.u32 %s265, 3
      %s267 = smul.addr %s266, 4
      %s268 = scalar_lea.vmem %s184, %s267
      %v269 = vld [vmem:[%s268] sm:$0xf]
      %v270 = vld [vmem:[%s268 + $0x4] sm:$0xf]
      %v271 = vld [vmem:[%s268 + $0xc] sm:$0xf]
      %v272 = vld [vmem:[%s268 + $0x10] sm:$0xf]
      %v273 = vld [vmem:[%s268 + $0x18] sm:$0xf]
      %v274 = vld [vmem:[%s268 + $0x1c] sm:$0xf]
      %v275 = vld [vmem:[%s268 + $0x24] sm:$0xf]
      %v276 = vld [vmem:[%s268 + $0x28] sm:$0xf]
      %v277 = vld [vmem:[%s268 + $0x30] sm:$0xf]
      %v278 = vld [vmem:[%s268 + $0x34] sm:$0xf]
      %v279 = vld [vmem:[%s268 + $0x3c] sm:$0xf]
      %v280 = vld [vmem:[%s268 + $0x40] sm:$0xf]
      %v281 = vld [vmem:[%s268 + $0x48] sm:$0xf]
      %v282 = vld [vmem:[%s268 + $0x4c] sm:$0xf]
      %v283 = vld [vmem:[%s268 + $0x54] sm:$0xf]
      %v284 = vld [vmem:[%s268 + $0x58] sm:$0xf]
      %v285 = vld [vmem:[%s268 + $0x60] sm:$0xf]
      %v286 = vld [vmem:[%s268 + $0x64] sm:$0xf]
      %v287 = vld [vmem:[%s268 + $0x6c] sm:$0xf]
      %v288 = vld [vmem:[%s268 + $0x70] sm:$0xf]
      %v289 = vld [vmem:[%s268 + $0x78] sm:$0xf]
      %v290 = vld [vmem:[%s268 + $0x7c] sm:$0xf]
      %v291 = vld [vmem:[%s268 + $0x84] sm:$0xf]
      %v292 = vld [vmem:[%s268 + $0x88] sm:$0xf]
      %v293 = vld [vmem:[%s268 + $0x90] sm:$0xf]
      %v294 = vld [vmem:[%s268 + $0x94] sm:$0xf]
      %v295 = vld [vmem:[%s268 + $0x9c] sm:$0xf]
      %v296 = vld [vmem:[%s268 + $0xa0] sm:$0xf]
      %v297 = vld [vmem:[%s268 + $0xa8] sm:$0xf]
      %v298 = vld [vmem:[%s268 + $0xac] sm:$0xf]
      %v299 = vld [vmem:[%s268 + $0xb4] sm:$0xf]
      %v300 = vld [vmem:[%s268 + $0xb8] sm:$0xf]
      %v301 = vld [vmem:[%s268 + $0x8] sm:$0x1]
      %v302 = vld [vmem:[%s268 + $0x14] sm:$0x1]
      %v303 = vld [vmem:[%s268 + $0x20] sm:$0x1]
      %v304 = vld [vmem:[%s268 + $0x2c] sm:$0x1]
      %v305 = vld [vmem:[%s268 + $0x38] sm:$0x1]
      %v306 = vld [vmem:[%s268 + $0x44] sm:$0x1]
      %v307 = vld [vmem:[%s268 + $0x50] sm:$0x1]
      %v308 = vld [vmem:[%s268 + $0x5c] sm:$0x1]
      %v309 = vld [vmem:[%s268 + $0x68] sm:$0x1]
      %v310 = vld [vmem:[%s268 + $0x74] sm:$0x1]
      %v311 = vld [vmem:[%s268 + $0x80] sm:$0x1]
      %v312 = vld [vmem:[%s268 + $0x8c] sm:$0x1]
      %v313 = vld [vmem:[%s268 + $0x98] sm:$0x1]
      %v314 = vld [vmem:[%s268 + $0xa4] sm:$0x1]
      %v315 = vld [vmem:[%s268 + $0xb0] sm:$0x1]
      %v316 = vld [vmem:[%s268 + $0xbc] sm:$0x1]
      %v317 = vld [vmem:[%s268] sm:$0xe]
      %v318 = vld [vmem:[%s268 + $0xc] sm:$0xe]
      %v319 = vld [vmem:[%s268 + $0x18] sm:$0xe]
      %v320 = vld [vmem:[%s268 + $0x24] sm:$0xe]
      %v321 = vld [vmem:[%s268 + $0x30] sm:$0xe]
      %v322 = vld [vmem:[%s268 + $0x3c] sm:$0xe]
      %v323 = vld [vmem:[%s268 + $0x48] sm:$0xe]
      %v324 = vld [vmem:[%s268 + $0x54] sm:$0xe]
      %v325 = vld [vmem:[%s268 + $0x60] sm:$0xe]
      %v326 = vld [vmem:[%s268 + $0x6c] sm:$0xe]
      %v327 = vld [vmem:[%s268 + $0x78] sm:$0xe]
      %v328 = vld [vmem:[%s268 + $0x84] sm:$0xe]
      %v329 = vld [vmem:[%s268 + $0x90] sm:$0xe]
      %v330 = vld [vmem:[%s268 + $0x9c] sm:$0xe]
      %v331 = vld [vmem:[%s268 + $0xa8] sm:$0xe]
      %v332 = vld [vmem:[%s268 + $0xb4] sm:$0xe]
      %s333 = sadd.s32 %s197, 2
      %s334 = smul.u32 %s333, 3
      %s335 = smul.addr %s334, 4
      %s336 = scalar_lea.vmem %s184, %s335
      %v337 = vld [vmem:[%s336] sm:$0xf]
      %v338 = vld [vmem:[%s336 + $0x4] sm:$0xf]
      %v339 = vld [vmem:[%s336 + $0xc] sm:$0xf]
      %v340 = vld [vmem:[%s336 + $0x10] sm:$0xf]
      %v341 = vld [vmem:[%s336 + $0x18] sm:$0xf]
      %v342 = vld [vmem:[%s336 + $0x1c] sm:$0xf]
      %v343 = vld [vmem:[%s336 + $0x24] sm:$0xf]
      %v344 = vld [vmem:[%s336 + $0x28] sm:$0xf]
      %v345 = vld [vmem:[%s336 + $0x30] sm:$0xf]
      %v346 = vld [vmem:[%s336 + $0x34] sm:$0xf]
      %v347 = vld [vmem:[%s336 + $0x3c] sm:$0xf]
      %v348 = vld [vmem:[%s336 + $0x40] sm:$0xf]
      %v349 = vld [vmem:[%s336 + $0x48] sm:$0xf]
      %v350 = vld [vmem:[%s336 + $0x4c] sm:$0xf]
      %v351 = vld [vmem:[%s336 + $0x54] sm:$0xf]
      %v352 = vld [vmem:[%s336 + $0x58] sm:$0xf]
      %v353 = vld [vmem:[%s336 + $0x60] sm:$0xf]
      %v354 = vld [vmem:[%s336 + $0x64] sm:$0xf]
      %v355 = vld [vmem:[%s336 + $0x6c] sm:$0xf]
      %v356 = vld [vmem:[%s336 + $0x70] sm:$0xf]
      %v357 = vld [vmem:[%s336 + $0x78] sm:$0xf]
      %v358 = vld [vmem:[%s336 + $0x7c] sm:$0xf]
      %v359 = vld [vmem:[%s336 + $0x84] sm:$0xf]
      %v360 = vld [vmem:[%s336 + $0x88] sm:$0xf]
      %v361 = vld [vmem:[%s336 + $0x90] sm:$0xf]
      %v362 = vld [vmem:[%s336 + $0x94] sm:$0xf]
      %v363 = vld [vmem:[%s336 + $0x9c] sm:$0xf]
      %v364 = vld [vmem:[%s336 + $0xa0] sm:$0xf]
      %v365 = vld [vmem:[%s336 + $0xa8] sm:$0xf]
      %v366 = vld [vmem:[%s336 + $0xac] sm:$0xf]
      %v367 = vld [vmem:[%s336 + $0xb4] sm:$0xf]
      %v368 = vld [vmem:[%s336 + $0xb8] sm:$0xf]
      %v369 = vld [vmem:[%s336 + $0x8] sm:$0x1]
      %v370 = vld [vmem:[%s336 + $0x14] sm:$0x1]
      %v371 = vld [vmem:[%s336 + $0x20] sm:$0x1]
      %v372 = vld [vmem:[%s336 + $0x2c] sm:$0x1]
      %v373 = vld [vmem:[%s336 + $0x38] sm:$0x1]
      %v374 = vld [vmem:[%s336 + $0x44] sm:$0x1]
      %v375 = vld [vmem:[%s336 + $0x50] sm:$0x1]
      %v376 = vld [vmem:[%s336 + $0x5c] sm:$0x1]
      %v377 = vld [vmem:[%s336 + $0x68] sm:$0x1]
      %v378 = vld [vmem:[%s336 + $0x74] sm:$0x1]
      %v379 = vld [vmem:[%s336 + $0x80] sm:$0x1]
      %v380 = vld [vmem:[%s336 + $0x8c] sm:$0x1]
      %v381 = vld [vmem:[%s336 + $0x98] sm:$0x1]
      %v382 = vld [vmem:[%s336 + $0xa4] sm:$0x1]
      %v383 = vld [vmem:[%s336 + $0xb0] sm:$0x1]
      %v384 = vld [vmem:[%s336 + $0xbc] sm:$0x1]
      %v385 = vld [vmem:[%s336] sm:$0xe]
      %v386 = vld [vmem:[%s336 + $0xc] sm:$0xe]
      %v387 = vld [vmem:[%s336 + $0x18] sm:$0xe]
      %v388 = vld [vmem:[%s336 + $0x24] sm:$0xe]
      %v389 = vld [vmem:[%s336 + $0x30] sm:$0xe]
      %v390 = vld [vmem:[%s336 + $0x3c] sm:$0xe]
      %v391 = vld [vmem:[%s336 + $0x48] sm:$0xe]
      %v392 = vld [vmem:[%s336 + $0x54] sm:$0xe]
      %v393 = vld [vmem:[%s336 + $0x60] sm:$0xe]
      %v394 = vld [vmem:[%s336 + $0x6c] sm:$0xe]
      %v395 = vld [vmem:[%s336 + $0x78] sm:$0xe]
      %v396 = vld [vmem:[%s336 + $0x84] sm:$0xe]
      %v397 = vld [vmem:[%s336 + $0x90] sm:$0xe]
      %v398 = vld [vmem:[%s336 + $0x9c] sm:$0xe]
      %v399 = vld [vmem:[%s336 + $0xa8] sm:$0xe]
      %v400 = vld [vmem:[%s336 + $0xb4] sm:$0xe]
      %v433 = vunpack.c.l.b16 %v201
      %v434 = vunpack.c.l.b16 %v202
      %v435 = vunpack.c.l.b16 %v203
      %v436 = vunpack.c.l.b16 %v204
      %v437 = vunpack.c.l.b16 %v205
      %v438 = vunpack.c.l.b16 %v206
      %v439 = vunpack.c.l.b16 %v207
      %v440 = vunpack.c.l.b16 %v208
      %v441 = vunpack.c.l.b16 %v209
      %v442 = vunpack.c.l.b16 %v210
      %v443 = vunpack.c.l.b16 %v211
      %v444 = vunpack.c.l.b16 %v212
      %v445 = vunpack.c.l.b16 %v213
      %v446 = vunpack.c.l.b16 %v214
      %v447 = vunpack.c.l.b16 %v215
      %v448 = vunpack.c.l.b16 %v216
      %v449 = vunpack.c.l.b16 %v217
      %v450 = vunpack.c.l.b16 %v218
      %v451 = vunpack.c.l.b16 %v219
      %v452 = vunpack.c.l.b16 %v220
      %v453 = vunpack.c.l.b16 %v221
      %v454 = vunpack.c.l.b16 %v222
      %v455 = vunpack.c.l.b16 %v223
      %v456 = vunpack.c.l.b16 %v224
      %v457 = vunpack.c.l.b16 %v225
      %v458 = vunpack.c.l.b16 %v226
      %v459 = vunpack.c.l.b16 %v227
      %v460 = vunpack.c.l.b16 %v228
      %v461 = vunpack.c.l.b16 %v229
      %v462 = vunpack.c.l.b16 %v230
      %v463 = vunpack.c.l.b16 %v231
      %v464 = vunpack.c.l.b16 %v232
      %v465 = vpack.c.b16 %v434, %v433
      %v466 = vpack.c.b16 %v436, %v435
      %v467 = vpack.c.b16 %v438, %v437
      %v468 = vpack.c.b16 %v440, %v439
      %v469 = vpack.c.b16 %v442, %v441
      %v470 = vpack.c.b16 %v444, %v443
      %v471 = vpack.c.b16 %v446, %v445
      %v472 = vpack.c.b16 %v448, %v447
      %v473 = vpack.c.b16 %v450, %v449
      %v474 = vpack.c.b16 %v452, %v451
      %v475 = vpack.c.b16 %v454, %v453
      %v476 = vpack.c.b16 %v456, %v455
      %v477 = vpack.c.b16 %v458, %v457
      %v478 = vpack.c.b16 %v460, %v459
      %v479 = vpack.c.b16 %v462, %v461
      %v480 = vpack.c.b16 %v464, %v463
      %v497 = vunpack.c.l.b16 %v233
      %v498 = vunpack.c.l.b16 %v234
      %v499 = vunpack.c.l.b16 %v235
      %v500 = vunpack.c.l.b16 %v236
      %v501 = vunpack.c.l.b16 %v237
      %v502 = vunpack.c.l.b16 %v238
      %v503 = vunpack.c.l.b16 %v239
      %v504 = vunpack.c.l.b16 %v240
      %v505 = vunpack.c.l.b16 %v241
      %v506 = vunpack.c.l.b16 %v242
      %v507 = vunpack.c.l.b16 %v243
      %v508 = vunpack.c.l.b16 %v244
      %v509 = vunpack.c.l.b16 %v245
      %v510 = vunpack.c.l.b16 %v246
      %v511 = vunpack.c.l.b16 %v247
      %v512 = vunpack.c.l.b16 %v248
      %v513 = vpack.c.b16 %v497, %v497
      %v514 = vpack.c.b16 %v498, %v498
      %v515 = vpack.c.b16 %v499, %v499
      %v516 = vpack.c.b16 %v500, %v500
      %v517 = vpack.c.b16 %v501, %v501
      %v518 = vpack.c.b16 %v502, %v502
      %v519 = vpack.c.b16 %v503, %v503
      %v520 = vpack.c.b16 %v504, %v504
      %v521 = vpack.c.b16 %v505, %v505
      %v522 = vpack.c.b16 %v506, %v506
      %v523 = vpack.c.b16 %v507, %v507
      %v524 = vpack.c.b16 %v508, %v508
      %v525 = vpack.c.b16 %v509, %v509
      %v526 = vpack.c.b16 %v510, %v510
      %v527 = vpack.c.b16 %v511, %v511
      %v528 = vpack.c.b16 %v512, %v512
      %vm529 = vsmask.f32 7424
      %v531 = vshrl.u32 %v465, 16
      %v533 = vshll.u32 %v465, 16
      %v535 = vrot.slane %v533, 1
      %v536 = vor.u32 %v531, %v535
      %v538 = vshll.u32 %v513, 16
      %v540 = vrot.slane %v538, 1
      %v541 = vsel %vm529, %v536, %v540
      %v543 = vshrl.u32 %v466, 16
      %v545 = vshll.u32 %v466, 16
      %v547 = vrot.slane %v545, 1
      %v548 = vor.u32 %v543, %v547
      %v550 = vshll.u32 %v514, 16
      %v552 = vrot.slane %v550, 1
      %v553 = vsel %vm529, %v548, %v552
      %v555 = vshrl.u32 %v467, 16
      %v557 = vshll.u32 %v467, 16
      %v559 = vrot.slane %v557, 1
      %v560 = vor.u32 %v555, %v559
      %v562 = vshll.u32 %v515, 16
      %v564 = vrot.slane %v562, 1
      %v565 = vsel %vm529, %v560, %v564
      %v567 = vshrl.u32 %v468, 16
      %v569 = vshll.u32 %v468, 16
      %v571 = vrot.slane %v569, 1
      %v572 = vor.u32 %v567, %v571
      %v574 = vshll.u32 %v516, 16
      %v576 = vrot.slane %v574, 1
      %v577 = vsel %vm529, %v572, %v576
      %v579 = vshrl.u32 %v469, 16
      %v581 = vshll.u32 %v469, 16
      %v583 = vrot.slane %v581, 1
      %v584 = vor.u32 %v579, %v583
      %v586 = vshll.u32 %v517, 16
      %v588 = vrot.slane %v586, 1
      %v589 = vsel %vm529, %v584, %v588
      %v591 = vshrl.u32 %v470, 16
      %v593 = vshll.u32 %v470, 16
      %v595 = vrot.slane %v593, 1
      %v596 = vor.u32 %v591, %v595
      %v598 = vshll.u32 %v518, 16
      %v600 = vrot.slane %v598, 1
      %v601 = vsel %vm529, %v596, %v600
      %v603 = vshrl.u32 %v471, 16
      %v605 = vshll.u32 %v471, 16
      %v607 = vrot.slane %v605, 1
      %v608 = vor.u32 %v603, %v607
      %v610 = vshll.u32 %v519, 16
      %v612 = vrot.slane %v610, 1
      %v613 = vsel %vm529, %v608, %v612
      %v615 = vshrl.u32 %v472, 16
      %v617 = vshll.u32 %v472, 16
      %v619 = vrot.slane %v617, 1
      %v620 = vor.u32 %v615, %v619
      %v622 = vshll.u32 %v520, 16
      %v624 = vrot.slane %v622, 1
      %v625 = vsel %vm529, %v620, %v624
      %v627 = vshrl.u32 %v473, 16
      %v629 = vshll.u32 %v473, 16
      %v631 = vrot.slane %v629, 1
      %v632 = vor.u32 %v627, %v631
      %v634 = vshll.u32 %v521, 16
      %v636 = vrot.slane %v634, 1
      %v637 = vsel %vm529, %v632, %v636
      %v639 = vshrl.u32 %v474, 16
      %v641 = vshll.u32 %v474, 16
      %v643 = vrot.slane %v641, 1
      %v644 = vor.u32 %v639, %v643
      %v646 = vshll.u32 %v522, 16
      %v648 = vrot.slane %v646, 1
      %v649 = vsel %vm529, %v644, %v648
      %v651 = vshrl.u32 %v475, 16
      %v653 = vshll.u32 %v475, 16
      %v655 = vrot.slane %v653, 1
      %v656 = vor.u32 %v651, %v655
      %v658 = vshll.u32 %v523, 16
      %v660 = vrot.slane %v658, 1
      %v661 = vsel %vm529, %v656, %v660
      %v663 = vshrl.u32 %v476, 16
      %v665 = vshll.u32 %v476, 16
      %v667 = vrot.slane %v665, 1
      %v668 = vor.u32 %v663, %v667
      %v670 = vshll.u32 %v524, 16
      %v672 = vrot.slane %v670, 1
      %v673 = vsel %vm529, %v668, %v672
      %v675 = vshrl.u32 %v477, 16
      %v677 = vshll.u32 %v477, 16
      %v679 = vrot.slane %v677, 1
      %v680 = vor.u32 %v675, %v679
      %v682 = vshll.u32 %v525, 16
      %v684 = vrot.slane %v682, 1
      %v685 = vsel %vm529, %v680, %v684
      %v687 = vshrl.u32 %v478, 16
      %v689 = vshll.u32 %v478, 16
      %v691 = vrot.slane %v689, 1
      %v692 = vor.u32 %v687, %v691
      %v694 = vshll.u32 %v526, 16
      %v696 = vrot.slane %v694, 1
      %v697 = vsel %vm529, %v692, %v696
      %v699 = vshrl.u32 %v479, 16
      %v701 = vshll.u32 %v479, 16
      %v703 = vrot.slane %v701, 1
      %v704 = vor.u32 %v699, %v703
      %v706 = vshll.u32 %v527, 16
      %v708 = vrot.slane %v706, 1
      %v709 = vsel %vm529, %v704, %v708
      %v711 = vshrl.u32 %v480, 16
      %v713 = vshll.u32 %v480, 16
      %v715 = vrot.slane %v713, 1
      %v716 = vor.u32 %v711, %v715
      %v718 = vshll.u32 %v528, 16
      %v720 = vrot.slane %v718, 1
      %v721 = vsel %vm529, %v716, %v720
      %722 = vrot.lane.b32.xlu0 %v541, 4
      %v723 = vpop.permute.xlu0 %722
      %724 = vrot.lane.b32.xlu0 %v553, 4
      %v725 = vpop.permute.xlu0 %724
      %726 = vrot.lane.b32.xlu0 %v565, 4
      %v727 = vpop.permute.xlu0 %726
      %728 = vrot.lane.b32.xlu0 %v577, 4
      %v729 = vpop.permute.xlu0 %728
      %730 = vrot.lane.b32.xlu0 %v589, 4
      %v731 = vpop.permute.xlu0 %730
      %732 = vrot.lane.b32.xlu0 %v601, 4
      %v733 = vpop.permute.xlu0 %732
      %734 = vrot.lane.b32.xlu0 %v613, 4
      %v735 = vpop.permute.xlu0 %734
      %736 = vrot.lane.b32.xlu0 %v625, 4
      %v737 = vpop.permute.xlu0 %736
      %738 = vrot.lane.b32.xlu0 %v637, 4
      %v739 = vpop.permute.xlu0 %738
      %740 = vrot.lane.b32.xlu0 %v649, 4
      %v741 = vpop.permute.xlu0 %740
      %742 = vrot.lane.b32.xlu0 %v661, 4
      %v743 = vpop.permute.xlu0 %742
      %744 = vrot.lane.b32.xlu0 %v673, 4
      %v745 = vpop.permute.xlu0 %744
      %746 = vrot.lane.b32.xlu0 %v685, 4
      %v747 = vpop.permute.xlu0 %746
      %748 = vrot.lane.b32.xlu0 %v697, 4
      %v749 = vpop.permute.xlu0 %748
      %750 = vrot.lane.b32.xlu0 %v709, 4
      %v751 = vpop.permute.xlu0 %750
      %752 = vrot.lane.b32.xlu0 %v721, 4
      %v753 = vpop.permute.xlu0 %752
      %v770 = vunpack.c.l.b16 %v249
      %v771 = vunpack.c.l.b16 %v250
      %v772 = vunpack.c.l.b16 %v251
      %v773 = vunpack.c.l.b16 %v252
      %v774 = vunpack.c.l.b16 %v253
      %v775 = vunpack.c.l.b16 %v254
      %v776 = vunpack.c.l.b16 %v255
      %v777 = vunpack.c.l.b16 %v256
      %v778 = vunpack.c.l.b16 %v257
      %v779 = vunpack.c.l.b16 %v258
      %v780 = vunpack.c.l.b16 %v259
      %v781 = vunpack.c.l.b16 %v260
      %v782 = vunpack.c.l.b16 %v261
      %v783 = vunpack.c.l.b16 %v262
      %v784 = vunpack.c.l.b16 %v263
      %v785 = vunpack.c.l.b16 %v264
      %v786 = vpack.c.b16 %v434, %v770
      %v787 = vpack.c.b16 %v436, %v771
      %v788 = vpack.c.b16 %v438, %v772
      %v789 = vpack.c.b16 %v440, %v773
      %v790 = vpack.c.b16 %v442, %v774
      %v791 = vpack.c.b16 %v444, %v775
      %v792 = vpack.c.b16 %v446, %v776
      %v793 = vpack.c.b16 %v448, %v777
      %v794 = vpack.c.b16 %v450, %v778
      %v795 = vpack.c.b16 %v452, %v779
      %v796 = vpack.c.b16 %v454, %v780
      %v797 = vpack.c.b16 %v456, %v781
      %v798 = vpack.c.b16 %v458, %v782
      %v799 = vpack.c.b16 %v460, %v783
      %v800 = vpack.c.b16 %v462, %v784
      %v801 = vpack.c.b16 %v464, %v785
      %vm802 = vcmask 1046528
      %v803 = vrot.slane %v786, 1
      %v804 = vrot.slane %v513, 1
      %v805 = vsel %vm802, %v803, %v804
      %v806 = vrot.slane %v787, 1
      %v807 = vrot.slane %v514, 1
      %v808 = vsel %vm802, %v806, %v807
      %v809 = vrot.slane %v788, 1
      %v810 = vrot.slane %v515, 1
      %v811 = vsel %vm802, %v809, %v810
      %v812 = vrot.slane %v789, 1
      %v813 = vrot.slane %v516, 1
      %v814 = vsel %vm802, %v812, %v813
      %v815 = vrot.slane %v790, 1
      %v816 = vrot.slane %v517, 1
      %v817 = vsel %vm802, %v815, %v816
      %v818 = vrot.slane %v791, 1
      %v819 = vrot.slane %v518, 1
      %v820 = vsel %vm802, %v818, %v819
      %v821 = vrot.slane %v792, 1
      %v822 = vrot.slane %v519, 1
      %v823 = vsel %vm802, %v821, %v822
      %v824 = vrot.slane %v793, 1
      %v825 = vrot.slane %v520, 1
      %v826 = vsel %vm802, %v824, %v825
      %v827 = vrot.slane %v794, 1
      %v828 = vrot.slane %v521, 1
      %v829 = vsel %vm802, %v827, %v828
      %v830 = vrot.slane %v795, 1
      %v831 = vrot.slane %v522, 1
      %v832 = vsel %vm802, %v830, %v831
      %v833 = vrot.slane %v796, 1
      %v834 = vrot.slane %v523, 1
      %v835 = vsel %vm802, %v833, %v834
      %v836 = vrot.slane %v797, 1
      %v837 = vrot.slane %v524, 1
      %v838 = vsel %vm802, %v836, %v837
      %v839 = vrot.slane %v798, 1
      %v840 = vrot.slane %v525, 1
      %v841 = vsel %vm802, %v839, %v840
      %v842 = vrot.slane %v799, 1
      %v843 = vrot.slane %v526, 1
      %v844 = vsel %vm802, %v842, %v843
      %v845 = vrot.slane %v800, 1
      %v846 = vrot.slane %v527, 1
      %v847 = vsel %vm802, %v845, %v846
      %v848 = vrot.slane %v801, 1
      %v849 = vrot.slane %v528, 1
      %v850 = vsel %vm802, %v848, %v849
      %851 = vrot.lane.b32.xlu0 %v805, 8
      %v852 = vpop.permute.xlu0 %851
      %853 = vrot.lane.b32.xlu0 %v808, 8
      %v854 = vpop.permute.xlu0 %853
      %855 = vrot.lane.b32.xlu0 %v811, 8
      %v856 = vpop.permute.xlu0 %855
      %857 = vrot.lane.b32.xlu0 %v814, 8
      %v858 = vpop.permute.xlu0 %857
      %859 = vrot.lane.b32.xlu0 %v817, 8
      %v860 = vpop.permute.xlu0 %859
      %861 = vrot.lane.b32.xlu0 %v820, 8
      %v862 = vpop.permute.xlu0 %861
      %863 = vrot.lane.b32.xlu0 %v823, 8
      %v864 = vpop.permute.xlu0 %863
      %865 = vrot.lane.b32.xlu0 %v826, 8
      %v866 = vpop.permute.xlu0 %865
      %867 = vrot.lane.b32.xlu0 %v829, 8
      %v868 = vpop.permute.xlu0 %867
      %869 = vrot.lane.b32.xlu0 %v832, 8
      %v870 = vpop.permute.xlu0 %869
      %871 = vrot.lane.b32.xlu0 %v835, 8
      %v872 = vpop.permute.xlu0 %871
      %873 = vrot.lane.b32.xlu0 %v838, 8
      %v874 = vpop.permute.xlu0 %873
      %875 = vrot.lane.b32.xlu0 %v841, 8
      %v876 = vpop.permute.xlu0 %875
      %877 = vrot.lane.b32.xlu0 %v844, 8
      %v878 = vpop.permute.xlu0 %877
      %879 = vrot.lane.b32.xlu0 %v847, 8
      %v880 = vpop.permute.xlu0 %879
      %881 = vrot.lane.b32.xlu0 %v850, 8
      %v882 = vpop.permute.xlu0 %881
      %v915 = vunpack.c.l.b16 %v269
      %v916 = vunpack.c.l.b16 %v270
      %v917 = vunpack.c.l.b16 %v271
      %v918 = vunpack.c.l.b16 %v272
      %v919 = vunpack.c.l.b16 %v273
      %v920 = vunpack.c.l.b16 %v274
      %v921 = vunpack.c.l.b16 %v275
      %v922 = vunpack.c.l.b16 %v276
      %v923 = vunpack.c.l.b16 %v277
      %v924 = vunpack.c.l.b16 %v278
      %v925 = vunpack.c.l.b16 %v279
      %v926 = vunpack.c.l.b16 %v280
      %v927 = vunpack.c.l.b16 %v281
      %v928 = vunpack.c.l.b16 %v282
      %v929 = vunpack.c.l.b16 %v283
      %v930 = vunpack.c.l.b16 %v284
      %v931 = vunpack.c.l.b16 %v285
      %v932 = vunpack.c.l.b16 %v286
      %v933 = vunpack.c.l.b16 %v287
      %v934 = vunpack.c.l.b16 %v288
      %v935 = vunpack.c.l.b16 %v289
      %v936 = vunpack.c.l.b16 %v290
      %v937 = vunpack.c.l.b16 %v291
      %v938 = vunpack.c.l.b16 %v292
      %v939 = vunpack.c.l.b16 %v293
      %v940 = vunpack.c.l.b16 %v294
      %v941 = vunpack.c.l.b16 %v295
      %v942 = vunpack.c.l.b16 %v296
      %v943 = vunpack.c.l.b16 %v297
      %v944 = vunpack.c.l.b16 %v298
      %v945 = vunpack.c.l.b16 %v299
      %v946 = vunpack.c.l.b16 %v300
      %v947 = vpack.c.b16 %v916, %v915
      %v948 = vpack.c.b16 %v918, %v917
      %v949 = vpack.c.b16 %v920, %v919
      %v950 = vpack.c.b16 %v922, %v921
      %v951 = vpack.c.b16 %v924, %v923
      %v952 = vpack.c.b16 %v926, %v925
      %v953 = vpack.c.b16 %v928, %v927
      %v954 = vpack.c.b16 %v930, %v929
      %v955 = vpack.c.b16 %v932, %v931
      %v956 = vpack.c.b16 %v934, %v933
      %v957 = vpack.c.b16 %v936, %v935
      %v958 = vpack.c.b16 %v938, %v937
      %v959 = vpack.c.b16 %v940, %v939
      %v960 = vpack.c.b16 %v942, %v941
      %v961 = vpack.c.b16 %v944, %v943
      %v962 = vpack.c.b16 %v946, %v945
      %963 = vrot.lane.b32.xlu0 %v947, 12
      %v964 = vpop.permute.xlu0 %963
      %965 = vrot.lane.b32.xlu0 %v948, 12
      %v966 = vpop.permute.xlu0 %965
      %967 = vrot.lane.b32.xlu0 %v949, 12
      %v968 = vpop.permute.xlu0 %967
      %969 = vrot.lane.b32.xlu0 %v950, 12
      %v970 = vpop.permute.xlu0 %969
      %971 = vrot.lane.b32.xlu0 %v951, 12
      %v972 = vpop.permute.xlu0 %971
      %973 = vrot.lane.b32.xlu0 %v952, 12
      %v974 = vpop.permute.xlu0 %973
      %975 = vrot.lane.b32.xlu0 %v953, 12
      %v976 = vpop.permute.xlu0 %975
      %977 = vrot.lane.b32.xlu0 %v954, 12
      %v978 = vpop.permute.xlu0 %977
      %979 = vrot.lane.b32.xlu0 %v955, 12
      %v980 = vpop.permute.xlu0 %979
      %981 = vrot.lane.b32.xlu0 %v956, 12
      %v982 = vpop.permute.xlu0 %981
      %983 = vrot.lane.b32.xlu0 %v957, 12
      %v984 = vpop.permute.xlu0 %983
      %985 = vrot.lane.b32.xlu0 %v958, 12
      %v986 = vpop.permute.xlu0 %985
      %987 = vrot.lane.b32.xlu0 %v959, 12
      %v988 = vpop.permute.xlu0 %987
      %989 = vrot.lane.b32.xlu0 %v960, 12
      %v990 = vpop.permute.xlu0 %989
      %991 = vrot.lane.b32.xlu0 %v961, 12
      %v992 = vpop.permute.xlu0 %991
      %993 = vrot.lane.b32.xlu0 %v962, 12
      %v994 = vpop.permute.xlu0 %993
      %v1011 = vunpack.c.l.b16 %v301
      %v1012 = vunpack.c.l.b16 %v302
      %v1013 = vunpack.c.l.b16 %v303
      %v1014 = vunpack.c.l.b16 %v304
      %v1015 = vunpack.c.l.b16 %v305
      %v1016 = vunpack.c.l.b16 %v306
      %v1017 = vunpack.c.l.b16 %v307
      %v1018 = vunpack.c.l.b16 %v308
      %v1019 = vunpack.c.l.b16 %v309
      %v1020 = vunpack.c.l.b16 %v310
      %v1021 = vunpack.c.l.b16 %v311
      %v1022 = vunpack.c.l.b16 %v312
      %v1023 = vunpack.c.l.b16 %v313
      %v1024 = vunpack.c.l.b16 %v314
      %v1025 = vunpack.c.l.b16 %v315
      %v1026 = vunpack.c.l.b16 %v316
      %v1027 = vpack.c.b16 %v1011, %v1011
      %v1028 = vpack.c.b16 %v1012, %v1012
      %v1029 = vpack.c.b16 %v1013, %v1013
      %v1030 = vpack.c.b16 %v1014, %v1014
      %v1031 = vpack.c.b16 %v1015, %v1015
      %v1032 = vpack.c.b16 %v1016, %v1016
      %v1033 = vpack.c.b16 %v1017, %v1017
      %v1034 = vpack.c.b16 %v1018, %v1018
      %v1035 = vpack.c.b16 %v1019, %v1019
      %v1036 = vpack.c.b16 %v1020, %v1020
      %v1037 = vpack.c.b16 %v1021, %v1021
      %v1038 = vpack.c.b16 %v1022, %v1022
      %v1039 = vpack.c.b16 %v1023, %v1023
      %v1040 = vpack.c.b16 %v1024, %v1024
      %v1041 = vpack.c.b16 %v1025, %v1025
      %v1042 = vpack.c.b16 %v1026, %v1026
      %v1044 = vshrl.u32 %v947, 16
      %v1046 = vshll.u32 %v947, 16
      %v1048 = vrot.slane %v1046, 1
      %v1049 = vor.u32 %v1044, %v1048
      %v1051 = vshll.u32 %v1027, 16
      %v1053 = vrot.slane %v1051, 1
      %v1054 = vsel %vm529, %v1049, %v1053
      %v1056 = vshrl.u32 %v948, 16
      %v1058 = vshll.u32 %v948, 16
      %v1060 = vrot.slane %v1058, 1
      %v1061 = vor.u32 %v1056, %v1060
      %v1063 = vshll.u32 %v1028, 16
      %v1065 = vrot.slane %v1063, 1
      %v1066 = vsel %vm529, %v1061, %v1065
      %v1068 = vshrl.u32 %v949, 16
      %v1070 = vshll.u32 %v949, 16
      %v1072 = vrot.slane %v1070, 1
      %v1073 = vor.u32 %v1068, %v1072
      %v1075 = vshll.u32 %v1029, 16
      %v1077 = vrot.slane %v1075, 1
      %v1078 = vsel %vm529, %v1073, %v1077
      %v1080 = vshrl.u32 %v950, 16
      %v1082 = vshll.u32 %v950, 16
      %v1084 = vrot.slane %v1082, 1
      %v1085 = vor.u32 %v1080, %v1084
      %v1087 = vshll.u32 %v1030, 16
      %v1089 = vrot.slane %v1087, 1
      %v1090 = vsel %vm529, %v1085, %v1089
      %v1092 = vshrl.u32 %v951, 16
      %v1094 = vshll.u32 %v951, 16
      %v1096 = vrot.slane %v1094, 1
      %v1097 = vor.u32 %v1092, %v1096
      %v1099 = vshll.u32 %v1031, 16
      %v1101 = vrot.slane %v1099, 1
      %v1102 = vsel %vm529, %v1097, %v1101
      %v1104 = vshrl.u32 %v952, 16
      %v1106 = vshll.u32 %v952, 16
      %v1108 = vrot.slane %v1106, 1
      %v1109 = vor.u32 %v1104, %v1108
      %v1111 = vshll.u32 %v1032, 16
      %v1113 = vrot.slane %v1111, 1
      %v1114 = vsel %vm529, %v1109, %v1113
      %v1116 = vshrl.u32 %v953, 16
      %v1118 = vshll.u32 %v953, 16
      %v1120 = vrot.slane %v1118, 1
      %v1121 = vor.u32 %v1116, %v1120
      %v1123 = vshll.u32 %v1033, 16
      %v1125 = vrot.slane %v1123, 1
      %v1126 = vsel %vm529, %v1121, %v1125
      %v1128 = vshrl.u32 %v954, 16
      %v1130 = vshll.u32 %v954, 16
      %v1132 = vrot.slane %v1130, 1
      %v1133 = vor.u32 %v1128, %v1132
      %v1135 = vshll.u32 %v1034, 16
      %v1137 = vrot.slane %v1135, 1
      %v1138 = vsel %vm529, %v1133, %v1137
      %v1140 = vshrl.u32 %v955, 16
      %v1142 = vshll.u32 %v955, 16
      %v1144 = vrot.slane %v1142, 1
      %v1145 = vor.u32 %v1140, %v1144
      %v1147 = vshll.u32 %v1035, 16
      %v1149 = vrot.slane %v1147, 1
      %v1150 = vsel %vm529, %v1145, %v1149
      %v1152 = vshrl.u32 %v956, 16
      %v1154 = vshll.u32 %v956, 16
      %v1156 = vrot.slane %v1154, 1
      %v1157 = vor.u32 %v1152, %v1156
      %v1159 = vshll.u32 %v1036, 16
      %v1161 = vrot.slane %v1159, 1
      %v1162 = vsel %vm529, %v1157, %v1161
      %v1164 = vshrl.u32 %v957, 16
      %v1166 = vshll.u32 %v957, 16
      %v1168 = vrot.slane %v1166, 1
      %v1169 = vor.u32 %v1164, %v1168
      %v1171 = vshll.u32 %v1037, 16
      %v1173 = vrot.slane %v1171, 1
      %v1174 = vsel %vm529, %v1169, %v1173
      %v1176 = vshrl.u32 %v958, 16
      %v1178 = vshll.u32 %v958, 16
      %v1180 = vrot.slane %v1178, 1
      %v1181 = vor.u32 %v1176, %v1180
      %v1183 = vshll.u32 %v1038, 16
      %v1185 = vrot.slane %v1183, 1
      %v1186 = vsel %vm529, %v1181, %v1185
      %v1188 = vshrl.u32 %v959, 16
      %v1190 = vshll.u32 %v959, 16
      %v1192 = vrot.slane %v1190, 1
      %v1193 = vor.u32 %v1188, %v1192
      %v1195 = vshll.u32 %v1039, 16
      %v1197 = vrot.slane %v1195, 1
      %v1198 = vsel %vm529, %v1193, %v1197
      %v1200 = vshrl.u32 %v960, 16
      %v1202 = vshll.u32 %v960, 16
      %v1204 = vrot.slane %v1202, 1
      %v1205 = vor.u32 %v1200, %v1204
      %v1207 = vshll.u32 %v1040, 16
      %v1209 = vrot.slane %v1207, 1
      %v1210 = vsel %vm529, %v1205, %v1209
      %v1212 = vshrl.u32 %v961, 16
      %v1214 = vshll.u32 %v961, 16
      %v1216 = vrot.slane %v1214, 1
      %v1217 = vor.u32 %v1212, %v1216
      %v1219 = vshll.u32 %v1041, 16
      %v1221 = vrot.slane %v1219, 1
      %v1222 = vsel %vm529, %v1217, %v1221
      %v1224 = vshrl.u32 %v962, 16
      %v1226 = vshll.u32 %v962, 16
      %v1228 = vrot.slane %v1226, 1
      %v1229 = vor.u32 %v1224, %v1228
      %v1231 = vshll.u32 %v1042, 16
      %v1233 = vrot.slane %v1231, 1
      %v1234 = vsel %vm529, %v1229, %v1233
      %1235 = vrot.lane.b32.xlu0 %v1054, 16
      %v1236 = vpop.permute.xlu0 %1235
      %1237 = vrot.lane.b32.xlu0 %v1066, 16
      %v1238 = vpop.permute.xlu0 %1237
      %1239 = vrot.lane.b32.xlu0 %v1078, 16
      %v1240 = vpop.permute.xlu0 %1239
      %1241 = vrot.lane.b32.xlu0 %v1090, 16
      %v1242 = vpop.permute.xlu0 %1241
      %1243 = vrot.lane.b32.xlu0 %v1102, 16
      %v1244 = vpop.permute.xlu0 %1243
      %1245 = vrot.lane.b32.xlu0 %v1114, 16
      %v1246 = vpop.permute.xlu0 %1245
      %1247 = vrot.lane.b32.xlu0 %v1126, 16
      %v1248 = vpop.permute.xlu0 %1247
      %1249 = vrot.lane.b32.xlu0 %v1138, 16
      %v1250 = vpop.permute.xlu0 %1249
      %1251 = vrot.lane.b32.xlu0 %v1150, 16
      %v1252 = vpop.permute.xlu0 %1251
      %1253 = vrot.lane.b32.xlu0 %v1162, 16
      %v1254 = vpop.permute.xlu0 %1253
      %1255 = vrot.lane.b32.xlu0 %v1174, 16
      %v1256 = vpop.permute.xlu0 %1255
      %1257 = vrot.lane.b32.xlu0 %v1186, 16
      %v1258 = vpop.permute.xlu0 %1257
      %1259 = vrot.lane.b32.xlu0 %v1198, 16
      %v1260 = vpop.permute.xlu0 %1259
      %1261 = vrot.lane.b32.xlu0 %v1210, 16
      %v1262 = vpop.permute.xlu0 %1261
      %1263 = vrot.lane.b32.xlu0 %v1222, 16
      %v1264 = vpop.permute.xlu0 %1263
      %1265 = vrot.lane.b32.xlu0 %v1234, 16
      %v1266 = vpop.permute.xlu0 %1265
      %v1283 = vunpack.c.l.b16 %v317
      %v1284 = vunpack.c.l.b16 %v318
      %v1285 = vunpack.c.l.b16 %v319
      %v1286 = vunpack.c.l.b16 %v320
      %v1287 = vunpack.c.l.b16 %v321
      %v1288 = vunpack.c.l.b16 %v322
      %v1289 = vunpack.c.l.b16 %v323
      %v1290 = vunpack.c.l.b16 %v324
      %v1291 = vunpack.c.l.b16 %v325
      %v1292 = vunpack.c.l.b16 %v326
      %v1293 = vunpack.c.l.b16 %v327
      %v1294 = vunpack.c.l.b16 %v328
      %v1295 = vunpack.c.l.b16 %v329
      %v1296 = vunpack.c.l.b16 %v330
      %v1297 = vunpack.c.l.b16 %v331
      %v1298 = vunpack.c.l.b16 %v332
      %v1299 = vpack.c.b16 %v916, %v1283
      %v1300 = vpack.c.b16 %v918, %v1284
      %v1301 = vpack.c.b16 %v920, %v1285
      %v1302 = vpack.c.b16 %v922, %v1286
      %v1303 = vpack.c.b16 %v924, %v1287
      %v1304 = vpack.c.b16 %v926, %v1288
      %v1305 = vpack.c.b16 %v928, %v1289
      %v1306 = vpack.c.b16 %v930, %v1290
      %v1307 = vpack.c.b16 %v932, %v1291
      %v1308 = vpack.c.b16 %v934, %v1292
      %v1309 = vpack.c.b16 %v936, %v1293
      %v1310 = vpack.c.b16 %v938, %v1294
      %v1311 = vpack.c.b16 %v940, %v1295
      %v1312 = vpack.c.b16 %v942, %v1296
      %v1313 = vpack.c.b16 %v944, %v1297
      %v1314 = vpack.c.b16 %v946, %v1298
      %v1315 = vrot.slane %v1299, 1
      %v1316 = vrot.slane %v1027, 1
      %v1317 = vsel %vm802, %v1315, %v1316
      %v1318 = vrot.slane %v1300, 1
      %v1319 = vrot.slane %v1028, 1
      %v1320 = vsel %vm802, %v1318, %v1319
      %v1321 = vrot.slane %v1301, 1
      %v1322 = vrot.slane %v1029, 1
      %v1323 = vsel %vm802, %v1321, %v1322
      %v1324 = vrot.slane %v1302, 1
      %v1325 = vrot.slane %v1030, 1
      %v1326 = vsel %vm802, %v1324, %v1325
      %v1327 = vrot.slane %v1303, 1
      %v1328 = vrot.slane %v1031, 1
      %v1329 = vsel %vm802, %v1327, %v1328
      %v1330 = vrot.slane %v1304, 1
      %v1331 = vrot.slane %v1032, 1
      %v1332 = vsel %vm802, %v1330, %v1331
      %v1333 = vrot.slane %v1305, 1
      %v1334 = vrot.slane %v1033, 1
      %v1335 = vsel %vm802, %v1333, %v1334
      %v1336 = vrot.slane %v1306, 1
      %v1337 = vrot.slane %v1034, 1
      %v1338 = vsel %vm802, %v1336, %v1337
      %v1339 = vrot.slane %v1307, 1
      %v1340 = vrot.slane %v1035, 1
      %v1341 = vsel %vm802, %v1339, %v1340
      %v1342 = vrot.slane %v1308, 1
      %v1343 = vrot.slane %v1036, 1
      %v1344 = vsel %vm802, %v1342, %v1343
      %v1345 = vrot.slane %v1309, 1
      %v1346 = vrot.slane %v1037, 1
      %v1347 = vsel %vm802, %v1345, %v1346
      %v1348 = vrot.slane %v1310, 1
      %v1349 = vrot.slane %v1038, 1
      %v1350 = vsel %vm802, %v1348, %v1349
      %v1351 = vrot.slane %v1311, 1
      %v1352 = vrot.slane %v1039, 1
      %v1353 = vsel %vm802, %v1351, %v1352
      %v1354 = vrot.slane %v1312, 1
      %v1355 = vrot.slane %v1040, 1
      %v1356 = vsel %vm802, %v1354, %v1355
      %v1357 = vrot.slane %v1313, 1
      %v1358 = vrot.slane %v1041, 1
      %v1359 = vsel %vm802, %v1357, %v1358
      %v1360 = vrot.slane %v1314, 1
      %v1361 = vrot.slane %v1042, 1
      %v1362 = vsel %vm802, %v1360, %v1361
      %1363 = vrot.lane.b32.xlu0 %v1317, 20
      %v1364 = vpop.permute.xlu0 %1363
      %1365 = vrot.lane.b32.xlu0 %v1320, 20
      %v1366 = vpop.permute.xlu0 %1365
      %1367 = vrot.lane.b32.xlu0 %v1323, 20
      %v1368 = vpop.permute.xlu0 %1367
      %1369 = vrot.lane.b32.xlu0 %v1326, 20
      %v1370 = vpop.permute.xlu0 %1369
      %1371 = vrot.lane.b32.xlu0 %v1329, 20
      %v1372 = vpop.permute.xlu0 %1371
      %1373 = vrot.lane.b32.xlu0 %v1332, 20
      %v1374 = vpop.permute.xlu0 %1373
      %1375 = vrot.lane.b32.xlu0 %v1335, 20
      %v1376 = vpop.permute.xlu0 %1375
      %1377 = vrot.lane.b32.xlu0 %v1338, 20
      %v1378 = vpop.permute.xlu0 %1377
      %1379 = vrot.lane.b32.xlu0 %v1341, 20
      %v1380 = vpop.permute.xlu0 %1379
      %1381 = vrot.lane.b32.xlu0 %v1344, 20
      %v1382 = vpop.permute.xlu0 %1381
      %1383 = vrot.lane.b32.xlu0 %v1347, 20
      %v1384 = vpop.permute.xlu0 %1383
      %1385 = vrot.lane.b32.xlu0 %v1350, 20
      %v1386 = vpop.permute.xlu0 %1385
      %1387 = vrot.lane.b32.xlu0 %v1353, 20
      %v1388 = vpop.permute.xlu0 %1387
      %1389 = vrot.lane.b32.xlu0 %v1356, 20
      %v1390 = vpop.permute.xlu0 %1389
      %1391 = vrot.lane.b32.xlu0 %v1359, 20
      %v1392 = vpop.permute.xlu0 %1391
      %1393 = vrot.lane.b32.xlu0 %v1362, 20
      %v1394 = vpop.permute.xlu0 %1393
      %v1427 = vunpack.c.l.b16 %v337
      %v1428 = vunpack.c.l.b16 %v338
      %v1429 = vunpack.c.l.b16 %v339
      %v1430 = vunpack.c.l.b16 %v340
      %v1431 = vunpack.c.l.b16 %v341
      %v1432 = vunpack.c.l.b16 %v342
      %v1433 = vunpack.c.l.b16 %v343
      %v1434 = vunpack.c.l.b16 %v344
      %v1435 = vunpack.c.l.b16 %v345
      %v1436 = vunpack.c.l.b16 %v346
      %v1437 = vunpack.c.l.b16 %v347
      %v1438 = vunpack.c.l.b16 %v348
      %v1439 = vunpack.c.l.b16 %v349
      %v1440 = vunpack.c.l.b16 %v350
      %v1441 = vunpack.c.l.b16 %v351
      %v1442 = vunpack.c.l.b16 %v352
      %v1443 = vunpack.c.l.b16 %v353
      %v1444 = vunpack.c.l.b16 %v354
      %v1445 = vunpack.c.l.b16 %v355
      %v1446 = vunpack.c.l.b16 %v356
      %v1447 = vunpack.c.l.b16 %v357
      %v1448 = vunpack.c.l.b16 %v358
      %v1449 = vunpack.c.l.b16 %v359
      %v1450 = vunpack.c.l.b16 %v360
      %v1451 = vunpack.c.l.b16 %v361
      %v1452 = vunpack.c.l.b16 %v362
      %v1453 = vunpack.c.l.b16 %v363
      %v1454 = vunpack.c.l.b16 %v364
      %v1455 = vunpack.c.l.b16 %v365
      %v1456 = vunpack.c.l.b16 %v366
      %v1457 = vunpack.c.l.b16 %v367
      %v1458 = vunpack.c.l.b16 %v368
      %v1459 = vpack.c.b16 %v1428, %v1427
      %v1460 = vpack.c.b16 %v1430, %v1429
      %v1461 = vpack.c.b16 %v1432, %v1431
      %v1462 = vpack.c.b16 %v1434, %v1433
      %v1463 = vpack.c.b16 %v1436, %v1435
      %v1464 = vpack.c.b16 %v1438, %v1437
      %v1465 = vpack.c.b16 %v1440, %v1439
      %v1466 = vpack.c.b16 %v1442, %v1441
      %v1467 = vpack.c.b16 %v1444, %v1443
      %v1468 = vpack.c.b16 %v1446, %v1445
      %v1469 = vpack.c.b16 %v1448, %v1447
      %v1470 = vpack.c.b16 %v1450, %v1449
      %v1471 = vpack.c.b16 %v1452, %v1451
      %v1472 = vpack.c.b16 %v1454, %v1453
      %v1473 = vpack.c.b16 %v1456, %v1455
      %v1474 = vpack.c.b16 %v1458, %v1457
      %1475 = vrot.lane.b32.xlu0 %v1459, 24
      %v1476 = vpop.permute.xlu0 %1475
      %1477 = vrot.lane.b32.xlu0 %v1460, 24
      %v1478 = vpop.permute.xlu0 %1477
      %1479 = vrot.lane.b32.xlu0 %v1461, 24
      %v1480 = vpop.permute.xlu0 %1479
      %1481 = vrot.lane.b32.xlu0 %v1462, 24
      %v1482 = vpop.permute.xlu0 %1481
      %1483 = vrot.lane.b32.xlu0 %v1463, 24
      %v1484 = vpop.permute.xlu0 %1483
      %1485 = vrot.lane.b32.xlu0 %v1464, 24
      %v1486 = vpop.permute.xlu0 %1485
      %1487 = vrot.lane.b32.xlu0 %v1465, 24
      %v1488 = vpop.permute.xlu0 %1487
      %1489 = vrot.lane.b32.xlu0 %v1466, 24
      %v1490 = vpop.permute.xlu0 %1489
      %1491 = vrot.lane.b32.xlu0 %v1467, 24
      %v1492 = vpop.permute.xlu0 %1491
      %1493 = vrot.lane.b32.xlu0 %v1468, 24
      %v1494 = vpop.permute.xlu0 %1493
      %1495 = vrot.lane.b32.xlu0 %v1469, 24
      %v1496 = vpop.permute.xlu0 %1495
      %1497 = vrot.lane.b32.xlu0 %v1470, 24
      %v1498 = vpop.permute.xlu0 %1497
      %1499 = vrot.lane.b32.xlu0 %v1471, 24
      %v1500 = vpop.permute.xlu0 %1499
      %1501 = vrot.lane.b32.xlu0 %v1472, 24
      %v1502 = vpop.permute.xlu0 %1501
      %1503 = vrot.lane.b32.xlu0 %v1473, 24
      %v1504 = vpop.permute.xlu0 %1503
      %1505 = vrot.lane.b32.xlu0 %v1474, 24
      %v1506 = vpop.permute.xlu0 %1505
      %v1523 = vunpack.c.l.b16 %v369
      %v1524 = vunpack.c.l.b16 %v370
      %v1525 = vunpack.c.l.b16 %v371
      %v1526 = vunpack.c.l.b16 %v372
      %v1527 = vunpack.c.l.b16 %v373
      %v1528 = vunpack.c.l.b16 %v374
      %v1529 = vunpack.c.l.b16 %v375
      %v1530 = vunpack.c.l.b16 %v376
      %v1531 = vunpack.c.l.b16 %v377
      %v1532 = vunpack.c.l.b16 %v378
      %v1533 = vunpack.c.l.b16 %v379
      %v1534 = vunpack.c.l.b16 %v380
      %v1535 = vunpack.c.l.b16 %v381
      %v1536 = vunpack.c.l.b16 %v382
      %v1537 = vunpack.c.l.b16 %v383
      %v1538 = vunpack.c.l.b16 %v384
      %v1539 = vpack.c.b16 %v1523, %v1523
      %v1540 = vpack.c.b16 %v1524, %v1524
      %v1541 = vpack.c.b16 %v1525, %v1525
      %v1542 = vpack.c.b16 %v1526, %v1526
      %v1543 = vpack.c.b16 %v1527, %v1527
      %v1544 = vpack.c.b16 %v1528, %v1528
      %v1545 = vpack.c.b16 %v1529, %v1529
      %v1546 = vpack.c.b16 %v1530, %v1530
      %v1547 = vpack.c.b16 %v1531, %v1531
      %v1548 = vpack.c.b16 %v1532, %v1532
      %v1549 = vpack.c.b16 %v1533, %v1533
      %v1550 = vpack.c.b16 %v1534, %v1534
      %v1551 = vpack.c.b16 %v1535, %v1535
      %v1552 = vpack.c.b16 %v1536, %v1536
      %v1553 = vpack.c.b16 %v1537, %v1537
      %v1554 = vpack.c.b16 %v1538, %v1538
      %v1556 = vshrl.u32 %v1459, 16
      %v1558 = vshll.u32 %v1459, 16
      %v1560 = vrot.slane %v1558, 1
      %v1561 = vor.u32 %v1556, %v1560
      %v1563 = vshll.u32 %v1539, 16
      %v1565 = vrot.slane %v1563, 1
      %v1566 = vsel %vm529, %v1561, %v1565
      %v1568 = vshrl.u32 %v1460, 16
      %v1570 = vshll.u32 %v1460, 16
      %v1572 = vrot.slane %v1570, 1
      %v1573 = vor.u32 %v1568, %v1572
      %v1575 = vshll.u32 %v1540, 16
      %v1577 = vrot.slane %v1575, 1
      %v1578 = vsel %vm529, %v1573, %v1577
      %v1580 = vshrl.u32 %v1461, 16
      %v1582 = vshll.u32 %v1461, 16
      %v1584 = vrot.slane %v1582, 1
      %v1585 = vor.u32 %v1580, %v1584
      %v1587 = vshll.u32 %v1541, 16
      %v1589 = vrot.slane %v1587, 1
      %v1590 = vsel %vm529, %v1585, %v1589
      %v1592 = vshrl.u32 %v1462, 16
      %v1594 = vshll.u32 %v1462, 16
      %v1596 = vrot.slane %v1594, 1
      %v1597 = vor.u32 %v1592, %v1596
      %v1599 = vshll.u32 %v1542, 16
      %v1601 = vrot.slane %v1599, 1
      %v1602 = vsel %vm529, %v1597, %v1601
      %v1604 = vshrl.u32 %v1463, 16
      %v1606 = vshll.u32 %v1463, 16
      %v1608 = vrot.slane %v1606, 1
      %v1609 = vor.u32 %v1604, %v1608
      %v1611 = vshll.u32 %v1543, 16
      %v1613 = vrot.slane %v1611, 1
      %v1614 = vsel %vm529, %v1609, %v1613
      %v1616 = vshrl.u32 %v1464, 16
      %v1618 = vshll.u32 %v1464, 16
      %v1620 = vrot.slane %v1618, 1
      %v1621 = vor.u32 %v1616, %v1620
      %v1623 = vshll.u32 %v1544, 16
      %v1625 = vrot.slane %v1623, 1
      %v1626 = vsel %vm529, %v1621, %v1625
      %v1628 = vshrl.u32 %v1465, 16
      %v1630 = vshll.u32 %v1465, 16
      %v1632 = vrot.slane %v1630, 1
      %v1633 = vor.u32 %v1628, %v1632
      %v1635 = vshll.u32 %v1545, 16
      %v1637 = vrot.slane %v1635, 1
      %v1638 = vsel %vm529, %v1633, %v1637
      %v1640 = vshrl.u32 %v1466, 16
      %v1642 = vshll.u32 %v1466, 16
      %v1644 = vrot.slane %v1642, 1
      %v1645 = vor.u32 %v1640, %v1644
      %v1647 = vshll.u32 %v1546, 16
      %v1649 = vrot.slane %v1647, 1
      %v1650 = vsel %vm529, %v1645, %v1649
      %v1652 = vshrl.u32 %v1467, 16
      %v1654 = vshll.u32 %v1467, 16
      %v1656 = vrot.slane %v1654, 1
      %v1657 = vor.u32 %v1652, %v1656
      %v1659 = vshll.u32 %v1547, 16
      %v1661 = vrot.slane %v1659, 1
      %v1662 = vsel %vm529, %v1657, %v1661
      %v1664 = vshrl.u32 %v1468, 16
      %v1666 = vshll.u32 %v1468, 16
      %v1668 = vrot.slane %v1666, 1
      %v1669 = vor.u32 %v1664, %v1668
      %v1671 = vshll.u32 %v1548, 16
      %v1673 = vrot.slane %v1671, 1
      %v1674 = vsel %vm529, %v1669, %v1673
      %v1676 = vshrl.u32 %v1469, 16
      %v1678 = vshll.u32 %v1469, 16
      %v1680 = vrot.slane %v1678, 1
      %v1681 = vor.u32 %v1676, %v1680
      %v1683 = vshll.u32 %v1549, 16
      %v1685 = vrot.slane %v1683, 1
      %v1686 = vsel %vm529, %v1681, %v1685
      %v1688 = vshrl.u32 %v1470, 16
      %v1690 = vshll.u32 %v1470, 16
      %v1692 = vrot.slane %v1690, 1
      %v1693 = vor.u32 %v1688, %v1692
      %v1695 = vshll.u32 %v1550, 16
      %v1697 = vrot.slane %v1695, 1
      %v1698 = vsel %vm529, %v1693, %v1697
      %v1700 = vshrl.u32 %v1471, 16
      %v1702 = vshll.u32 %v1471, 16
      %v1704 = vrot.slane %v1702, 1
      %v1705 = vor.u32 %v1700, %v1704
      %v1707 = vshll.u32 %v1551, 16
      %v1709 = vrot.slane %v1707, 1
      %v1710 = vsel %vm529, %v1705, %v1709
      %v1712 = vshrl.u32 %v1472, 16
      %v1714 = vshll.u32 %v1472, 16
      %v1716 = vrot.slane %v1714, 1
      %v1717 = vor.u32 %v1712, %v1716
      %v1719 = vshll.u32 %v1552, 16
      %v1721 = vrot.slane %v1719, 1
      %v1722 = vsel %vm529, %v1717, %v1721
      %v1724 = vshrl.u32 %v1473, 16
      %v1726 = vshll.u32 %v1473, 16
      %v1728 = vrot.slane %v1726, 1
      %v1729 = vor.u32 %v1724, %v1728
      %v1731 = vshll.u32 %v1553, 16
      %v1733 = vrot.slane %v1731, 1
      %v1734 = vsel %vm529, %v1729, %v1733
      %v1736 = vshrl.u32 %v1474, 16
      %v1738 = vshll.u32 %v1474, 16
      %v1740 = vrot.slane %v1738, 1
      %v1741 = vor.u32 %v1736, %v1740
      %v1743 = vshll.u32 %v1554, 16
      %v1745 = vrot.slane %v1743, 1
      %v1746 = vsel %vm529, %v1741, %v1745
      %1747 = vrot.lane.b32.xlu0 %v1566, 28
      %v1748 = vpop.permute.xlu0 %1747
      %1749 = vrot.lane.b32.xlu0 %v1578, 28
      %v1750 = vpop.permute.xlu0 %1749
      %1751 = vrot.lane.b32.xlu0 %v1590, 28
      %v1752 = vpop.permute.xlu0 %1751
      %1753 = vrot.lane.b32.xlu0 %v1602, 28
      %v1754 = vpop.permute.xlu0 %1753
      %1755 = vrot.lane.b32.xlu0 %v1614, 28
      %v1756 = vpop.permute.xlu0 %1755
      %1757 = vrot.lane.b32.xlu0 %v1626, 28
      %v1758 = vpop.permute.xlu0 %1757
      %1759 = vrot.lane.b32.xlu0 %v1638, 28
      %v1760 = vpop.permute.xlu0 %1759
      %1761 = vrot.lane.b32.xlu0 %v1650, 28
      %v1762 = vpop.permute.xlu0 %1761
      %1763 = vrot.lane.b32.xlu0 %v1662, 28
      %v1764 = vpop.permute.xlu0 %1763
      %1765 = vrot.lane.b32.xlu0 %v1674, 28
      %v1766 = vpop.permute.xlu0 %1765
      %1767 = vrot.lane.b32.xlu0 %v1686, 28
      %v1768 = vpop.permute.xlu0 %1767
      %1769 = vrot.lane.b32.xlu0 %v1698, 28
      %v1770 = vpop.permute.xlu0 %1769
      %1771 = vrot.lane.b32.xlu0 %v1710, 28
      %v1772 = vpop.permute.xlu0 %1771
      %1773 = vrot.lane.b32.xlu0 %v1722, 28
      %v1774 = vpop.permute.xlu0 %1773
      %1775 = vrot.lane.b32.xlu0 %v1734, 28
      %v1776 = vpop.permute.xlu0 %1775
      %1777 = vrot.lane.b32.xlu0 %v1746, 28
      %v1778 = vpop.permute.xlu0 %1777
      %v1795 = vunpack.c.l.b16 %v385
      %v1796 = vunpack.c.l.b16 %v386
      %v1797 = vunpack.c.l.b16 %v387
      %v1798 = vunpack.c.l.b16 %v388
      %v1799 = vunpack.c.l.b16 %v389
      %v1800 = vunpack.c.l.b16 %v390
      %v1801 = vunpack.c.l.b16 %v391
      %v1802 = vunpack.c.l.b16 %v392
      %v1803 = vunpack.c.l.b16 %v393
      %v1804 = vunpack.c.l.b16 %v394
      %v1805 = vunpack.c.l.b16 %v395
      %v1806 = vunpack.c.l.b16 %v396
      %v1807 = vunpack.c.l.b16 %v397
      %v1808 = vunpack.c.l.b16 %v398
      %v1809 = vunpack.c.l.b16 %v399
      %v1810 = vunpack.c.l.b16 %v400
      %v1811 = vpack.c.b16 %v1428, %v1795
      %v1812 = vpack.c.b16 %v1430, %v1796
      %v1813 = vpack.c.b16 %v1432, %v1797
      %v1814 = vpack.c.b16 %v1434, %v1798
      %v1815 = vpack.c.b16 %v1436, %v1799
      %v1816 = vpack.c.b16 %v1438, %v1800
      %v1817 = vpack.c.b16 %v1440, %v1801
      %v1818 = vpack.c.b16 %v1442, %v1802
      %v1819 = vpack.c.b16 %v1444, %v1803
      %v1820 = vpack.c.b16 %v1446, %v1804
      %v1821 = vpack.c.b16 %v1448, %v1805
      %v1822 = vpack.c.b16 %v1450, %v1806
      %v1823 = vpack.c.b16 %v1452, %v1807
      %v1824 = vpack.c.b16 %v1454, %v1808
      %v1825 = vpack.c.b16 %v1456, %v1809
      %v1826 = vpack.c.b16 %v1458, %v1810
      %v1827 = vrot.slane %v1811, 1
      %v1828 = vrot.slane %v1539, 1
      %v1829 = vsel %vm802, %v1827, %v1828
      %v1830 = vrot.slane %v1812, 1
      %v1831 = vrot.slane %v1540, 1
      %v1832 = vsel %vm802, %v1830, %v1831
      %v1833 = vrot.slane %v1813, 1
      %v1834 = vrot.slane %v1541, 1
      %v1835 = vsel %vm802, %v1833, %v1834
      %v1836 = vrot.slane %v1814, 1
      %v1837 = vrot.slane %v1542, 1
      %v1838 = vsel %vm802, %v1836, %v1837
      %v1839 = vrot.slane %v1815, 1
      %v1840 = vrot.slane %v1543, 1
      %v1841 = vsel %vm802, %v1839, %v1840
      %v1842 = vrot.slane %v1816, 1
      %v1843 = vrot.slane %v1544, 1
      %v1844 = vsel %vm802, %v1842, %v1843
      %v1845 = vrot.slane %v1817, 1
      %v1846 = vrot.slane %v1545, 1
      %v1847 = vsel %vm802, %v1845, %v1846
      %v1848 = vrot.slane %v1818, 1
      %v1849 = vrot.slane %v1546, 1
      %v1850 = vsel %vm802, %v1848, %v1849
      %v1851 = vrot.slane %v1819, 1
      %v1852 = vrot.slane %v1547, 1
      %v1853 = vsel %vm802, %v1851, %v1852
      %v1854 = vrot.slane %v1820, 1
      %v1855 = vrot.slane %v1548, 1
      %v1856 = vsel %vm802, %v1854, %v1855
      %v1857 = vrot.slane %v1821, 1
      %v1858 = vrot.slane %v1549, 1
      %v1859 = vsel %vm802, %v1857, %v1858
      %v1860 = vrot.slane %v1822, 1
      %v1861 = vrot.slane %v1550, 1
      %v1862 = vsel %vm802, %v1860, %v1861
      %v1863 = vrot.slane %v1823, 1
      %v1864 = vrot.slane %v1551, 1
      %v1865 = vsel %vm802, %v1863, %v1864
      %v1866 = vrot.slane %v1824, 1
      %v1867 = vrot.slane %v1552, 1
      %v1868 = vsel %vm802, %v1866, %v1867
      %v1869 = vrot.slane %v1825, 1
      %v1870 = vrot.slane %v1553, 1
      %v1871 = vsel %vm802, %v1869, %v1870
      %v1872 = vrot.slane %v1826, 1
      %v1873 = vrot.slane %v1554, 1
      %v1874 = vsel %vm802, %v1872, %v1873
      %1875 = vrot.lane.b32.xlu0 %v1829, 32
      %v1876 = vpop.permute.xlu0 %1875
      %1877 = vrot.lane.b32.xlu0 %v1832, 32
      %v1878 = vpop.permute.xlu0 %1877
      %1879 = vrot.lane.b32.xlu0 %v1835, 32
      %v1880 = vpop.permute.xlu0 %1879
      %1881 = vrot.lane.b32.xlu0 %v1838, 32
      %v1882 = vpop.permute.xlu0 %1881
      %1883 = vrot.lane.b32.xlu0 %v1841, 32
      %v1884 = vpop.permute.xlu0 %1883
      %1885 = vrot.lane.b32.xlu0 %v1844, 32
      %v1886 = vpop.permute.xlu0 %1885
      %1887 = vrot.lane.b32.xlu0 %v1847, 32
      %v1888 = vpop.permute.xlu0 %1887
      %1889 = vrot.lane.b32.xlu0 %v1850, 32
      %v1890 = vpop.permute.xlu0 %1889
      %1891 = vrot.lane.b32.xlu0 %v1853, 32
      %v1892 = vpop.permute.xlu0 %1891
      %1893 = vrot.lane.b32.xlu0 %v1856, 32
      %v1894 = vpop.permute.xlu0 %1893
      %1895 = vrot.lane.b32.xlu0 %v1859, 32
      %v1896 = vpop.permute.xlu0 %1895
      %1897 = vrot.lane.b32.xlu0 %v1862, 32
      %v1898 = vpop.permute.xlu0 %1897
      %1899 = vrot.lane.b32.xlu0 %v1865, 32
      %v1900 = vpop.permute.xlu0 %1899
      %1901 = vrot.lane.b32.xlu0 %v1868, 32
      %v1902 = vpop.permute.xlu0 %1901
      %1903 = vrot.lane.b32.xlu0 %v1871, 32
      %v1904 = vpop.permute.xlu0 %1903
      %1905 = vrot.lane.b32.xlu0 %v1874, 32
      %v1906 = vpop.permute.xlu0 %1905
      %vm1907 = vcmask 31744
      %v1909 = vsel %vm1907, %v465, %v723
      %v1911 = vsel %vm1907, %v466, %v725
      %v1913 = vsel %vm1907, %v467, %v727
      %v1915 = vsel %vm1907, %v468, %v729
      %v1917 = vsel %vm1907, %v469, %v731
      %v1919 = vsel %vm1907, %v470, %v733
      %v1921 = vsel %vm1907, %v471, %v735
      %v1923 = vsel %vm1907, %v472, %v737
      %v1925 = vsel %vm1907, %v473, %v739
      %v1927 = vsel %vm1907, %v474, %v741
      %v1929 = vsel %vm1907, %v475, %v743
      %v1931 = vsel %vm1907, %v476, %v745
      %v1933 = vsel %vm1907, %v477, %v747
      %v1935 = vsel %vm1907, %v478, %v749
      %v1937 = vsel %vm1907, %v479, %v751
      %v1939 = vsel %vm1907, %v480, %v753
      %vm1940 = vcmask 64512
      %v1942 = vsel %vm1940, %v1909, %v852
      %v1944 = vsel %vm1940, %v1911, %v854
      %v1946 = vsel %vm1940, %v1913, %v856
      %v1948 = vsel %vm1940, %v1915, %v858
      %v1950 = vsel %vm1940, %v1917, %v860
      %v1952 = vsel %vm1940, %v1919, %v862
      %v1954 = vsel %vm1940, %v1921, %v864
      %v1956 = vsel %vm1940, %v1923, %v866
      %v1958 = vsel %vm1940, %v1925, %v868
      %v1960 = vsel %vm1940, %v1927, %v870
      %v1962 = vsel %vm1940, %v1929, %v872
      %v1964 = vsel %vm1940, %v1931, %v874
      %v1966 = vsel %vm1940, %v1933, %v876
      %v1968 = vsel %vm1940, %v1935, %v878
      %v1970 = vsel %vm1940, %v1937, %v880
      %v1972 = vsel %vm1940, %v1939, %v882
      %vm1973 = vcmask 97280
      %v1975 = vsel %vm1973, %v1942, %v964
      %v1977 = vsel %vm1973, %v1944, %v966
      %v1979 = vsel %vm1973, %v1946, %v968
      %v1981 = vsel %vm1973, %v1948, %v970
      %v1983 = vsel %vm1973, %v1950, %v972
      %v1985 = vsel %vm1973, %v1952, %v974
      %v1987 = vsel %vm1973, %v1954, %v976
      %v1989 = vsel %vm1973, %v1956, %v978
      %v1991 = vsel %vm1973, %v1958, %v980
      %v1993 = vsel %vm1973, %v1960, %v982
      %v1995 = vsel %vm1973, %v1962, %v984
      %v1997 = vsel %vm1973, %v1964, %v986
      %v1999 = vsel %vm1973, %v1966, %v988
      %v2001 = vsel %vm1973, %v1968, %v990
      %v2003 = vsel %vm1973, %v1970, %v992
      %v2005 = vsel %vm1973, %v1972, %v994
      %vm2006 = vcmask 130048
      %v2008 = vsel %vm2006, %v1975, %v1236
      %v2010 = vsel %vm2006, %v1977, %v1238
      %v2012 = vsel %vm2006, %v1979, %v1240
      %v2014 = vsel %vm2006, %v1981, %v1242
      %v2016 = vsel %vm2006, %v1983, %v1244
      %v2018 = vsel %vm2006, %v1985, %v1246
      %v2020 = vsel %vm2006, %v1987, %v1248
      %v2022 = vsel %vm2006, %v1989, %v1250
      %v2024 = vsel %vm2006, %v1991, %v1252
      %v2026 = vsel %vm2006, %v1993, %v1254
      %v2028 = vsel %vm2006, %v1995, %v1256
      %v2030 = vsel %vm2006, %v1997, %v1258
      %v2032 = vsel %vm2006, %v1999, %v1260
      %v2034 = vsel %vm2006, %v2001, %v1262
      %v2036 = vsel %vm2006, %v2003, %v1264
      %v2038 = vsel %vm2006, %v2005, %v1266
      %vm2039 = vcmask 162816
      %v2041 = vsel %vm2039, %v2008, %v1364
      %v2043 = vsel %vm2039, %v2010, %v1366
      %v2045 = vsel %vm2039, %v2012, %v1368
      %v2047 = vsel %vm2039, %v2014, %v1370
      %v2049 = vsel %vm2039, %v2016, %v1372
      %v2051 = vsel %vm2039, %v2018, %v1374
      %v2053 = vsel %vm2039, %v2020, %v1376
      %v2055 = vsel %vm2039, %v2022, %v1378
      %v2057 = vsel %vm2039, %v2024, %v1380
      %v2059 = vsel %vm2039, %v2026, %v1382
      %v2061 = vsel %vm2039, %v2028, %v1384
      %v2063 = vsel %vm2039, %v2030, %v1386
      %v2065 = vsel %vm2039, %v2032, %v1388
      %v2067 = vsel %vm2039, %v2034, %v1390
      %v2069 = vsel %vm2039, %v2036, %v1392
      %v2071 = vsel %vm2039, %v2038, %v1394
      %vm2072 = vcmask 195584
      %v2074 = vsel %vm2072, %v2041, %v1476
      %v2076 = vsel %vm2072, %v2043, %v1478
      %v2078 = vsel %vm2072, %v2045, %v1480
      %v2080 = vsel %vm2072, %v2047, %v1482
      %v2082 = vsel %vm2072, %v2049, %v1484
      %v2084 = vsel %vm2072, %v2051, %v1486
      %v2086 = vsel %vm2072, %v2053, %v1488
      %v2088 = vsel %vm2072, %v2055, %v1490
      %v2090 = vsel %vm2072, %v2057, %v1492
      %v2092 = vsel %vm2072, %v2059, %v1494
      %v2094 = vsel %vm2072, %v2061, %v1496
      %v2096 = vsel %vm2072, %v2063, %v1498
      %v2098 = vsel %vm2072, %v2065, %v1500
      %v2100 = vsel %vm2072, %v2067, %v1502
      %v2102 = vsel %vm2072, %v2069, %v1504
      %v2104 = vsel %vm2072, %v2071, %v1506
      %vm2105 = vcmask 228352
      %v2107 = vsel %vm2105, %v2074, %v1748
      %v2109 = vsel %vm2105, %v2076, %v1750
      %v2111 = vsel %vm2105, %v2078, %v1752
      %v2113 = vsel %vm2105, %v2080, %v1754
      %v2115 = vsel %vm2105, %v2082, %v1756
      %v2117 = vsel %vm2105, %v2084, %v1758
      %v2119 = vsel %vm2105, %v2086, %v1760
      %v2121 = vsel %vm2105, %v2088, %v1762
      %v2123 = vsel %vm2105, %v2090, %v1764
      %v2125 = vsel %vm2105, %v2092, %v1766
      %v2127 = vsel %vm2105, %v2094, %v1768
      %v2129 = vsel %vm2105, %v2096, %v1770
      %v2131 = vsel %vm2105, %v2098, %v1772
      %v2133 = vsel %vm2105, %v2100, %v1774
      %v2135 = vsel %vm2105, %v2102, %v1776
      %v2137 = vsel %vm2105, %v2104, %v1778
      %vm2138 = vcmask 261120
      %v2140 = vsel %vm2138, %v2107, %v1876
      %v2142 = vsel %vm2138, %v2109, %v1878
      %v2144 = vsel %vm2138, %v2111, %v1880
      %v2146 = vsel %vm2138, %v2113, %v1882
      %v2148 = vsel %vm2138, %v2115, %v1884
      %v2150 = vsel %vm2138, %v2117, %v1886
      %v2152 = vsel %vm2138, %v2119, %v1888
      %v2154 = vsel %vm2138, %v2121, %v1890
      %v2156 = vsel %vm2138, %v2123, %v1892
      %v2158 = vsel %vm2138, %v2125, %v1894
      %v2160 = vsel %vm2138, %v2127, %v1896
      %v2162 = vsel %vm2138, %v2129, %v1898
      %v2164 = vsel %vm2138, %v2131, %v1900
      %v2166 = vsel %vm2138, %v2133, %v1902
      %v2168 = vsel %vm2138, %v2135, %v1904
      %v2170 = vsel %vm2138, %v2137, %v1906
      %v2171 = vld [vmem:[%s1] sm:$0xf]
      %v2172 = vld [vmem:[%s1 + $0x4] sm:$0xf]
      %v2173 = vld [vmem:[%s1 + $0x8] sm:$0xf]
      %v2174 = vld [vmem:[%s1 + $0xc] sm:$0xf]
      %v2175 = vld [vmem:[%s1 + $0x10] sm:$0x3]
      %v2176 = vld [vmem:[%s2] sm:$0x1]
      %v2178 = vperm.slane %v2176, 0
      %v2185 = vunpack.c.l.b16 %v2171
      %v2186 = vunpack.c.l.b16 %v2172
      %v2187 = vunpack.c.l.b16 %v2173
      %v2188 = vunpack.c.l.b16 %v2174
      %v2189 = vunpack.c.l.b16 %v2175
      %v2190 = vpack.c.b16 %v2186, %v2185
      %v2191 = vpack.c.b16 %v2188, %v2187
      %v2192 = vpack.c.b16 %v2189, %v2189
      %vm2195 = vcmask 293888
      %v2196 = vsel %vm2195, %v2140, 0
      %v2198 = vsel %vm2195, %v2142, 0
      %v2200 = vsel %vm2195, %v2144, 0
      %v2202 = vsel %vm2195, %v2146, 0
      %v2204 = vsel %vm2195, %v2148, 0
      %v2206 = vsel %vm2195, %v2150, 0
      %v2208 = vsel %vm2195, %v2152, 0
      %v2210 = vsel %vm2195, %v2154, 0
      %v2212 = vsel %vm2195, %v2156, 0
      %v2214 = vsel %vm2195, %v2158, 0
      %v2216 = vsel %vm2195, %v2160, 0
      %v2218 = vsel %vm2195, %v2162, 0
      %v2220 = vsel %vm2195, %v2164, 0
      %v2222 = vsel %vm2195, %v2166, 0
      %v2224 = vsel %vm2195, %v2168, 0
      %v2226 = vsel %vm2195, %v2170, 0
      %vm2228 = vcmask 1041408
      %v2230 = vsel %vm2228, %v2192, 0
      %2232 = vmatpush.bf16.msra.mxu0 0
      %2233 = vmatpush.bf16.msra.mxu0 0
      %2234 = vmatpush.bf16.msra.mxu0 0
      %2235 = vmatpush.bf16.msra.mxu0 0
      %2236 = vmatpush.bf16.msra.mxu0 0
      %2237 = vmatpush.bf16.msra.mxu0 %v2230
      %2238 = vmatpush.bf16.msra.mxu0 %v2191
      %2239 = vmatpush.bf16.msra.mxu0 %v2190
      %2240 = vmatmul.bf16.gmra.mxu0 %v2196
      %v2241 = vpop.f32.mrf.mxu0
      %v2242 = vadd.f32 %v2178, %v2241
      %v2243 = vpop.f32.mrf.mxu0
      %v2244 = vadd.f32 %v2178, %v2243
      %2245 = vmatmul.bf16.gmra.mxu0 %v2198
      %v2246 = vpop.f32.mrf.mxu0
      %v2247 = vadd.f32 %v2178, %v2246
      %v2248 = vpop.f32.mrf.mxu0
      %v2249 = vadd.f32 %v2178, %v2248
      %2250 = vmatmul.bf16.gmra.mxu0 %v2200
      %v2251 = vpop.f32.mrf.mxu0
      %v2252 = vadd.f32 %v2178, %v2251
      %v2253 = vpop.f32.mrf.mxu0
      %v2254 = vadd.f32 %v2178, %v2253
      %2255 = vmatmul.bf16.gmra.mxu0 %v2202
      %v2256 = vpop.f32.mrf.mxu0
      %v2257 = vadd.f32 %v2178, %v2256
      %v2258 = vpop.f32.mrf.mxu0
      %v2259 = vadd.f32 %v2178, %v2258
      %2260 = vmatmul.bf16.gmra.mxu0 %v2204
      %v2261 = vpop.f32.mrf.mxu0
      %v2262 = vadd.f32 %v2178, %v2261
      %v2263 = vpop.f32.mrf.mxu0
      %v2264 = vadd.f32 %v2178, %v2263
      %2265 = vmatmul.bf16.gmra.mxu0 %v2206
      %v2266 = vpop.f32.mrf.mxu0
      %v2267 = vadd.f32 %v2178, %v2266
      %v2268 = vpop.f32.mrf.mxu0
      %v2269 = vadd.f32 %v2178, %v2268
      %2270 = vmatmul.bf16.gmra.mxu0 %v2208
      %v2271 = vpop.f32.mrf.mxu0
      %v2272 = vadd.f32 %v2178, %v2271
      %v2273 = vpop.f32.mrf.mxu0
      %v2274 = vadd.f32 %v2178, %v2273
      %2275 = vmatmul.bf16.gmra.mxu0 %v2210
      %v2276 = vpop.f32.mrf.mxu0
      %v2277 = vadd.f32 %v2178, %v2276
      %v2278 = vpop.f32.mrf.mxu0
      %v2279 = vadd.f32 %v2178, %v2278
      %2280 = vmatmul.bf16.gmra.mxu0 %v2212
      %v2281 = vpop.f32.mrf.mxu0
      %v2282 = vadd.f32 %v2178, %v2281
      %v2283 = vpop.f32.mrf.mxu0
      %v2284 = vadd.f32 %v2178, %v2283
      %2285 = vmatmul.bf16.gmra.mxu0 %v2214
      %v2286 = vpop.f32.mrf.mxu0
      %v2287 = vadd.f32 %v2178, %v2286
      %v2288 = vpop.f32.mrf.mxu0
      %v2289 = vadd.f32 %v2178, %v2288
      %2290 = vmatmul.bf16.gmra.mxu0 %v2216
      %v2291 = vpop.f32.mrf.mxu0
      %v2292 = vadd.f32 %v2178, %v2291
      %v2293 = vpop.f32.mrf.mxu0
      %v2294 = vadd.f32 %v2178, %v2293
      %2295 = vmatmul.bf16.gmra.mxu0 %v2218
      %v2296 = vpop.f32.mrf.mxu0
      %v2297 = vadd.f32 %v2178, %v2296
      %v2298 = vpop.f32.mrf.mxu0
      %v2299 = vadd.f32 %v2178, %v2298
      %2300 = vmatmul.bf16.gmra.mxu0 %v2220
      %v2301 = vpop.f32.mrf.mxu0
      %v2302 = vadd.f32 %v2178, %v2301
      %v2303 = vpop.f32.mrf.mxu0
      %v2304 = vadd.f32 %v2178, %v2303
      %2305 = vmatmul.bf16.gmra.mxu0 %v2222
      %v2306 = vpop.f32.mrf.mxu0
      %v2307 = vadd.f32 %v2178, %v2306
      %v2308 = vpop.f32.mrf.mxu0
      %v2309 = vadd.f32 %v2178, %v2308
      %2310 = vmatmul.bf16.gmra.mxu0 %v2224
      %v2311 = vpop.f32.mrf.mxu0
      %v2312 = vadd.f32 %v2178, %v2311
      %v2313 = vpop.f32.mrf.mxu0
      %v2314 = vadd.f32 %v2178, %v2313
      %2315 = vmatmul.bf16.gmra.mxu0 %v2226
      %v2316 = vpop.f32.mrf.mxu0
      %v2317 = vadd.f32 %v2178, %v2316
      %v2318 = vpop.f32.mrf.mxu0
      %v2319 = vadd.f32 %v2178, %v2318
      %2320 = vdwg.mxu0
      %v2321 = vmax.f32 %v2242, 0.0
      %v2322 = vmax.f32 %v2244, 0.0
      %v2323 = vmax.f32 %v2247, 0.0
      %v2324 = vmax.f32 %v2249, 0.0
      %v2325 = vmax.f32 %v2252, 0.0
      %v2326 = vmax.f32 %v2254, 0.0
      %v2327 = vmax.f32 %v2257, 0.0
      %v2328 = vmax.f32 %v2259, 0.0
      %v2329 = vmax.f32 %v2262, 0.0
      %v2330 = vmax.f32 %v2264, 0.0
      %v2331 = vmax.f32 %v2267, 0.0
      %v2332 = vmax.f32 %v2269, 0.0
      %v2333 = vmax.f32 %v2272, 0.0
      %v2334 = vmax.f32 %v2274, 0.0
      %v2335 = vmax.f32 %v2277, 0.0
      %v2336 = vmax.f32 %v2279, 0.0
      %v2337 = vmax.f32 %v2282, 0.0
      %v2338 = vmax.f32 %v2284, 0.0
      %v2339 = vmax.f32 %v2287, 0.0
      %v2340 = vmax.f32 %v2289, 0.0
      %v2341 = vmax.f32 %v2292, 0.0
      %v2342 = vmax.f32 %v2294, 0.0
      %v2343 = vmax.f32 %v2297, 0.0
      %v2344 = vmax.f32 %v2299, 0.0
      %v2345 = vmax.f32 %v2302, 0.0
      %v2346 = vmax.f32 %v2304, 0.0
      %v2347 = vmax.f32 %v2307, 0.0
      %v2348 = vmax.f32 %v2309, 0.0
      %v2349 = vmax.f32 %v2312, 0.0
      %v2350 = vmax.f32 %v2314, 0.0
      %v2351 = vmax.f32 %v2317, 0.0
      %v2352 = vmax.f32 %v2319, 0.0
      %2353 = vst.msk [vmem:[%s194] sm:$0xff] %vm1907, %v2321
      %2354 = vst.msk [vmem:[%s194 + $0x8] sm:$0xff] %vm1907, %v2322
      %2355 = vst.msk [vmem:[%s194 + $0x10] sm:$0xff] %vm1907, %v2323
      %2356 = vst.msk [vmem:[%s194 + $0x18] sm:$0xff] %vm1907, %v2324
      %2357 = vst.msk [vmem:[%s194 + $0x20] sm:$0xff] %vm1907, %v2325
      %2358 = vst.msk [vmem:[%s194 + $0x28] sm:$0xff] %vm1907, %v2326
      %2359 = vst.msk [vmem:[%s194 + $0x30] sm:$0xff] %vm1907, %v2327
      %2360 = vst.msk [vmem:[%s194 + $0x38] sm:$0xff] %vm1907, %v2328
      %2361 = vst.msk [vmem:[%s194 + $0x40] sm:$0xff] %vm1907, %v2329
      %2362 = vst.msk [vmem:[%s194 + $0x48] sm:$0xff] %vm1907, %v2330
      %2363 = vst.msk [vmem:[%s194 + $0x50] sm:$0xff] %vm1907, %v2331
      %2364 = vst.msk [vmem:[%s194 + $0x58] sm:$0xff] %vm1907, %v2332
      %2365 = vst.msk [vmem:[%s194 + $0x60] sm:$0xff] %vm1907, %v2333
      %2366 = vst.msk [vmem:[%s194 + $0x68] sm:$0xff] %vm1907, %v2334
      %2367 = vst.msk [vmem:[%s194 + $0x70] sm:$0xff] %vm1907, %v2335
      %2368 = vst.msk [vmem:[%s194 + $0x78] sm:$0xff] %vm1907, %v2336
      %2369 = vst.msk [vmem:[%s194 + $0x80] sm:$0xff] %vm1907, %v2337
      %2370 = vst.msk [vmem:[%s194 + $0x88] sm:$0xff] %vm1907, %v2338
      %2371 = vst.msk [vmem:[%s194 + $0x90] sm:$0xff] %vm1907, %v2339
      %2372 = vst.msk [vmem:[%s194 + $0x98] sm:$0xff] %vm1907, %v2340
      %2373 = vst.msk [vmem:[%s194 + $0xa0] sm:$0xff] %vm1907, %v2341
      %2374 = vst.msk [vmem:[%s194 + $0xa8] sm:$0xff] %vm1907, %v2342
      %2375 = vst.msk [vmem:[%s194 + $0xb0] sm:$0xff] %vm1907, %v2343
      %2376 = vst.msk [vmem:[%s194 + $0xb8] sm:$0xff] %vm1907, %v2344
      %2377 = vst.msk [vmem:[%s194 + $0xc0] sm:$0xff] %vm1907, %v2345
      %2378 = vst.msk [vmem:[%s194 + $0xc8] sm:$0xff] %vm1907, %v2346
      %2379 = vst.msk [vmem:[%s194 + $0xd0] sm:$0xff] %vm1907, %v2347
      %2380 = vst.msk [vmem:[%s194 + $0xd8] sm:$0xff] %vm1907, %v2348
      %2381 = vst.msk [vmem:[%s194 + $0xe0] sm:$0xff] %vm1907, %v2349
      %2382 = vst.msk [vmem:[%s194 + $0xe8] sm:$0xff] %vm1907, %v2350
      %2383 = vst.msk [vmem:[%s194 + $0xf0] sm:$0xff] %vm1907, %v2351
      %2384 = vst.msk [vmem:[%s194 + $0xf8] sm:$0xff] %vm1907, %v2352
      %s2385 = smul.u32 16, %s19
      %p2386 = scmp.lt.s32.totalorder %s18, 1
      %s2387 = scalar_select %p2386, %s18, 1
      %p2388 = scmp.lt.s32.totalorder %s2385, 15
      %s2389 = scalar_select %p2388, %s2385, 15
      %s2390 = smul.addr %s2389, 2
      %s2391 = smul.addr %s2387, 32
      %s2392 = sadd.s32 %s2390, %s2391
      %s2393 = smul.addr %s2392, 8
      %s2394 = scalar_lea.vmem %s3, %s2393
      // Predicated region
      $region33: #{tpu_custom_call.1} parent=31 // pred_check
        %p2395 = pneg %p114
      $region34: #{tpu_custom_call.1} parent=31 // pred_check_branch
        %2397 = sbr.rel (%p2395) target = $region36
      $region35: #{tpu_custom_call.1} parent=31 // pred_region
        %s2398 = smul.u32 16, %s19
      $region36: #{tpu_custom_call.1} parent=31 // pred_fallthru
        _
    $region32: #{tpu_custom_call.1} parent=5 // pred_fallthru
      _
    %p2399 = scmp.le.s32.totalorder 2, %s9
    // Predicated region
    $region37: #{tpu_custom_call.1} parent=5 // pred_check
      %p2400 = pneg %p2399
    $region38: #{tpu_custom_call.1} parent=5 // pred_check_branch
      %2402 = sbr.rel (%p2400) target = $region40
    $region39: #{tpu_custom_call.1} parent=5 // pred_region
      %s2403 = ssub.s32 %s9, 2
      // Predicated region
      $region41: #{tpu_custom_call.1} parent=39 // pred_check
        %p2404 = pneg %p120
      $region42: #{tpu_custom_call.1} parent=39 // pred_check_branch
        %2406 = sbr.rel (%p2404) target = $region44
      $region43: #{tpu_custom_call.1} parent=39 // pred_region
        %s2407 = smul.u32 16, %s21
        %p2408 = scmp.lt.s32.totalorder %s20, 1
        %s2409 = scalar_select %p2408, %s20, 1
        %p2410 = scmp.lt.s32.totalorder %s2407, 15
        %s2411 = scalar_select %p2410, %s2407, 15
        %s2412 = smul.addr %s2411, 2
        %s2413 = smul.addr %s2409, 32
        %s2414 = sadd.s32 %s2412, %s2413
        %s2415 = smul.addr %s2414, 8
        %s2416 = scalar_lea.vmem %s3, %s2415
      $region44: #{tpu_custom_call.1} parent=39 // pred_fallthru
        _
    $region40: #{tpu_custom_call.1} parent=5 // pred_fallthru
      _
  $region6: #{tpu_custom_call.1} parent=0 // loop_footer
    %s13 = sadd.s32 1, %s9
  $region7: #{tpu_custom_call.1} parent=0 // loop_footer_branch
    %8 = sbr.rel target = $region3
  $region8: #{tpu_custom_call.1} parent=0 // loop_exit
    _

</llo_original>
